<compile_context>
chip_gen: v5e
topology: v5e:2x2
jax: 0.10.0
libtpu: 0.0.40
codegen_flags: <defaults>
</compile_context>

<pallas_src>
import jax
import jax.numpy as jnp
from jax import lax
from jax.experimental import pallas as pl
from jax.experimental.pallas import tpu as pltpu

VOCAB = 50
VOCAB_PAD = 128   # pad the final projection to a full 128-lane group -> dense logits store
SEQ_LEN = 16      # model seq_len (max positional index)
HIDDEN = 32
PROJ = 64
N_HEAD = 2
HEAD_DIM = 16
HD = N_HEAD * HEAD_DIM          # == HIDDEN for this config
N_LAYERS = 2
PAD_IDX = 0
LN_EPS = 1e-5     # torch.nn.LayerNorm default
NEG_INF = -1e30   # additive mask value (exp underflows to exactly 0, like -inf fill)


# --------------------------- fused Pallas kernel ---------------------------

def _layer_norm(z, g, b):
    mu = jnp.mean(z, axis=-1, keepdims=True)
    var = jnp.mean((z - mu) ** 2, axis=-1, keepdims=True)          # biased var (torch LN)
    return (z - mu) * lax.rsqrt(var + LN_EPS) * g + b


def _fused_decoder_kernel(x_ref, pos_ref, mask_ref, tk_ref, g_ref,
                          wmat_ref, wff_ref, vec_ref, b1_ref, fin_ref,
                          logits_ref, mem_ref):
    f32 = jnp.float32
    x = x_ref[...]                     # [R, HIDDEN]     R = bs*qs
    pos = pos_ref[...]                 # [qs, HIDDEN]
    amask = mask_ref[...]              # [R, C]          C = bs*qs*qs  (additive 0 / -1e30)
    tk = tk_ref[...]                   # [C, R]   0/1 : key/value tiling over (b', q', k)
    gsh = g_ref[...]                   # [C, qs]  0/1 : relative left-shift fold
    R = x.shape[0]

    # per-head lane masks, hoisted out of all loops (review: hoist invariants, no lane slices)
    lane = lax.broadcasted_iota(jnp.int32, (1, HD), 1)
    hmasks = [((lane >= h * HEAD_DIM) & (lane < (h + 1) * HEAD_DIM)).astype(f32)
              for h in range(N_HEAD)]

    for l in range(N_LAYERS):
        mem_ref[l] = x                                  # new_mem[l] = input of layer l

        vec = vec_ref[l]                                # [8, HIDDEN] packed small vectors
        b1 = b1_ref[l]                                  # [1, PROJ]

        # projections (4 dense [R,32]x[32,32] matmuls; q / rw / rr are pre-scaled in wrapper)
        k_all = jnp.dot(x, wmat_ref[l, 0], preferred_element_type=f32)      # [R, HD]
        v_all = jnp.dot(x, wmat_ref[l, 1], preferred_element_type=f32)      # [R, HD]
        q_all = jnp.dot(x, wmat_ref[l, 2], preferred_element_type=f32)      # [R, HD]
        r_all = jnp.dot(pos, wmat_ref[l, 3], preferred_element_type=f32)    # [qs, HD]

        rwq = q_all + vec[5:6, :]                       # query + rw_bias (both pre-scaled)
        rrq = q_all + vec[6:7, :]                       # query + rr_bias

        # expanded key/value/rel over the (b', q', k) column space — single matmuls that fold
        # the per-(b,q) key gather and the relative left-shift (no in-kernel shift loop)
        k_exp = jnp.dot(tk, k_all, preferred_element_type=f32)              # [C, HD]
        v_exp = jnp.dot(tk, v_all, preferred_element_type=f32)              # [C, HD]
        r_exp = jnp.dot(gsh, r_all, preferred_element_type=f32)             # [C, HD]

        att = jnp.zeros((R, HD), f32)
        for h in range(N_HEAD):
            hm = hmasks[h]                              # [1, HD] 0/1 lane mask for head h
            ac = lax.dot_general(rwq * hm, k_exp, (((1,), (1,)), ((), ())),
                                 preferred_element_type=f32)                # [R, C]
            bd = lax.dot_general(rrq * hm, r_exp, (((1,), (1,)), ((), ())),
                                 preferred_element_type=f32)                # [R, C]
            s = ac + bd + amask                         # scale already folded into operands
            m = jnp.max(s, axis=-1, keepdims=True)
            e = jnp.exp(s - m)
            p = e * pl.reciprocal(jnp.sum(e, axis=-1, keepdims=True), approx=True)
            att = att + jnp.dot(p, v_exp, preferred_element_type=f32) * hm  # [R, HD]

        # o-projection, residual + post-LayerNorm (pre_lnorm=False); no scratch round trip
        o = jnp.dot(att, wmat_ref[l, 4], preferred_element_type=f32)        # [R, HIDDEN]
        x = _layer_norm(x + o, vec[0:1, :], vec[1:2, :])

        # TODO(synk): Residual_FF source not provided; standard Transformer-XL positionwise
        # FF (Linear-ReLU-Linear, residual, post-LayerNorm) assumed.
        hmid = jnp.maximum(
            jnp.dot(x, wff_ref[l, 0], preferred_element_type=f32) + b1, 0.0)        # [R, PROJ]
        f = lax.dot_general(hmid, wff_ref[l, 1], (((1,), (1,)), ((), ())),
                            preferred_element_type=f32) + vec[4:5, :]
        x = _layer_norm(x + f, vec[2:3, :], vec[3:4, :])

    # final projection (bias-free, zero-padded to 128 lanes) — one dense [R, 128] store
    logits_ref[...] = jnp.dot(x, fin_ref[...], preferred_element_type=f32)


def _build_pallas_forward(bs, qs):
    R = bs * qs
    vmem = pl.BlockSpec(memory_space=pltpu.MemorySpace.VMEM)
    return pl.pallas_call(
        _fused_decoder_kernel,
        out_shape=(jax.ShapeDtypeStruct((R, VOCAB_PAD), jnp.float32),
                   jax.ShapeDtypeStruct((N_LAYERS, R, HIDDEN), jnp.float32)),
        in_specs=[vmem] * 10,
        out_specs=(vmem, vmem),
    )


# --------------------------- JAX glue (gathers, masks, packing only) ---------------------------

@jax.jit
def transformer_decoder_forward(params, dec_input, dec_input_len):
    """Mirrors Transformer_Decoder.forward with memory=None, experimental_loss=0 (eval)."""
    bs, qs = dec_input.shape
    ms = 0
    ks = qs + ms
    R = bs * qs
    C = bs * qs * ks
    scale = 1.0 / (HEAD_DIM ** 0.5)

    # embeddings (gather = glue); dropout is identity at inference
    emb = params["word_emb"][dec_input]                               # [bs, qs, hidden]
    pos_idx = jnp.minimum(jnp.arange(ms, ks), SEQ_LEN)                # clamp_max(seq_len)
    pos_ebd = params["pos_emb"][pos_idx].astype(jnp.float32)          # [qs, hidden]

    # row / expanded-column index decompositions   (row = (b,q), col = (b', q', k))
    rb = jnp.arange(R) // qs
    rq = jnp.arange(R) % qs
    cb = jnp.arange(C) // (qs * ks)
    cq = (jnp.arange(C) // ks) % qs
    ck = jnp.arange(C) % ks

    # additive mask over the expanded column space: valid iff same batch block, same query
    # block, causal (dec_mask) and key not padded (mask_lengths reverse=True)
    valid = ((cb[None, :] == rb[:, None]) & (cq[None, :] == rq[:, None])
             & ((ck[None, :] - rq[:, None]) < (1 + ms))
             & (ck[None, :] < dec_input_len[rb][:, None]))
    amask = jnp.where(valid, 0.0, NEG_INF).astype(jnp.float32)        # [R, C]

    # constant expansion operators (fold key/value tiling + relative left-shift into matmuls)
    tk = (cb[:, None] * qs + ck[:, None] ==
          jnp.arange(R)[None, :]).astype(jnp.float32)                 # [C, R]
    rel = jnp.clip(ck - cq + (qs - 1), 0, ks - 1)
    gsh = (rel[:, None] == jnp.arange(ks)[None, :]).astype(jnp.float32)   # [C, ks]

    # packed weights (10 inputs total instead of 17 separate DMAs)
    wmat = jnp.stack([params["w_k"], params["w_v"], params["w_q"] * scale,
                      params["w_r"], params["w_o"]], axis=1)          # [L, 5, 32, 32]
    wff = jnp.stack([params["w1"],
                     jnp.transpose(params["w2"], (0, 2, 1))], axis=1)  # [L, 2, 32, 64]
    rw = jnp.broadcast_to(params["rw_bias"].reshape(1, HD) * scale, (N_LAYERS, HD))
    rr = jnp.broadcast_to(params["rr_bias"].reshape(1, HD) * scale, (N_LAYERS, HD))
    vecs = jnp.stack([params["ln1_g"], params["ln1_b"], params["ln2_g"], params["ln2_b"],
                      params["b2"], rw, rr,
                      jnp.zeros((N_LAYERS, HIDDEN), jnp.float32)], axis=1)   # [L, 8, 32]
    b1s = params["b1"].reshape(N_LAYERS, 1, PROJ)
    fin_pad = jnp.pad(params["final_w"],
                      ((0, 0), (0, VOCAB_PAD - VOCAB))).astype(jnp.float32)  # [32, 128]

    fwd = _build_pallas_forward(bs, qs)
    logits_full, mem_flat = fwd(
        emb.reshape(R, HIDDEN).astype(jnp.float32), pos_ebd, amask, tk, gsh,
        wmat, wff, vecs, b1s, fin_pad)

    # drop padded vocab lanes + last query row per batch in XLA (free slices)
    logits = (logits_full[:, :VOCAB].reshape(bs, qs, VOCAB)[:, :-1]
              .reshape(bs * (qs - 1), VOCAB))
    new_mem = [mem_flat[l].reshape(bs, qs, HIDDEN) for l in range(N_LAYERS)]
    return logits, new_mem


# --------------------------- pure-JAX reference (for self-check) ---------------------------

def _left_shift_reference(x, batch_size):
    # literal Rel_Multihead_Att._left_shift, x: [bs, qs, ks, n_head]
    b, q, k, n = x.shape
    zero_pad = jnp.zeros((b, q, 1, n), x.dtype)
    xp = jnp.concatenate([zero_pad, x], axis=2).reshape(b, k + 1, q, n)
    xs = xp[:, 1:].reshape(b, q, k, n)
    tril = (jnp.arange(k)[None, :] - jnp.arange(q)[:, None]) <= (k - batch_size)
    return xs * tril[None, :, :, None].astype(x.dtype)


def _ln_ref(z, g, b):
    mu = jnp.mean(z, axis=-1, keepdims=True)
    var = jnp.mean((z - mu) ** 2, axis=-1, keepdims=True)
    return (z - mu) * lax.rsqrt(var + LN_EPS) * g + b


def _reference_forward(params, dec_input, dec_input_len):
    bs, qs = dec_input.shape
    ms, ks = 0, dec_input.shape[1]
    emb = params["word_emb"][dec_input]
    pos_ebd = params["pos_emb"][jnp.minimum(jnp.arange(ms, ks), SEQ_LEN)]
    inp_masks = jnp.arange(qs)[None, :] >= dec_input_len[:, None]
    dec_mask = (jnp.arange(ks)[None, :] - jnp.arange(qs)[:, None]) >= (1 + ms)
    mask = inp_masks[:, None, :] | dec_mask[None]
    rw, rr = params["rw_bias"], params["rr_bias"]

    out = emb
    new_mem = []
    for l in range(N_LAYERS):
        new_mem.append(out)
        x2 = out.reshape(bs * qs, HIDDEN)
        key = x2 @ params["w_k"][l]
        value = x2 @ params["w_v"][l]
        query = x2 @ params["w_q"][l]
        rel = pos_ebd @ params["w_r"][l]
        q4 = query.reshape(bs, qs, N_HEAD, HEAD_DIM)
        k4 = key.reshape(bs, ks, N_HEAD, HEAD_DIM)
        v4 = value.reshape(bs, ks, N_HEAD, HEAD_DIM)
        r3 = rel.reshape(qs, N_HEAD, HEAD_DIM)
        AC = jnp.einsum('bqnd,bknd->bqkn', q4 + rw[None, None], k4)
        BD = jnp.einsum('bqnd,knd->bqkn', q4 + rr[None, None], r3)
        BD = _left_shift_reference(BD, bs)
        score = (AC + BD) * (1.0 / HEAD_DIM ** 0.5)
        score = jnp.where(mask[..., None], -jnp.inf, score)
        prob = jax.nn.softmax(score, axis=2)
        attended = jnp.einsum('bqkn,bknd->bqnd', prob, v4).reshape(bs * qs, HD)
        x2 = _ln_ref(x2 + attended @ params["w_o"][l],
                     params["ln1_g"][l], params["ln1_b"][l])
        h = jnp.maximum(x2 @ params["w1"][l] + params["b1"][l], 0.0)
        x2 = _ln_ref(x2 + h @ params["w2"][l] + params["b2"][l],
                     params["ln2_g"][l], params["ln2_b"][l])
        out = x2.reshape(bs, qs, HIDDEN)
    logits = out[:, :-1].reshape(bs * (qs - 1), HIDDEN) @ params["final_w"]
    return logits, new_mem


# --------------------------- deterministic parameter init ---------------------------

def init_params(key):
    def nrm(k, shape, s=0.02):
        return (s * jax.random.normal(k, shape)).astype(jnp.float32)

    keys = jax.random.split(key, 6 + N_LAYERS)
    word_emb = nrm(keys[0], (VOCAB, HIDDEN)).at[PAD_IDX].set(0.0)   # padding_idx row = 0
    pos_emb = nrm(keys[1], (SEQ_LEN, HIDDEN))
    rw_bias = nrm(keys[2], (N_HEAD, HEAD_DIM))
    rr_bias = nrm(keys[3], (N_HEAD, HEAD_DIM))
    final_w = nrm(keys[4], (HIDDEN, VOCAB))

    w_k, w_v, w_q, w_r, w_o = [], [], [], [], []
    w1, b1, w2, b2 = [], [], [], []
    ln1_g, ln1_b, ln2_g, ln2_b = [], [], [], []
    for i in range(N_LAYERS):
        lk = jax.random.split(keys[6 + i], 9)
        w_k.append(nrm(lk[0], (HIDDEN, HD)))
        w_v.append(nrm(lk[1], (HIDDEN, HD)))
        w_q.append(nrm(lk[2], (HIDDEN, HD)))
        w_r.append(nrm(lk[3], (HIDDEN, HD)))
        w_o.append(nrm(lk[4], (HD, HIDDEN)))
        ln1_g.append(jnp.ones((HIDDEN,), jnp.float32))
        ln1_b.append(jnp.zeros((HIDDEN,), jnp.float32))
        w1.append(nrm(lk[5], (HIDDEN, PROJ)))
        b1.append(nrm(lk[6], (PROJ,)))
        w2.append(nrm(lk[7], (PROJ, HIDDEN)))
        b2.append(nrm(lk[8], (HIDDEN,)))
        ln2_g.append(jnp.ones((HIDDEN,), jnp.float32))
        ln2_b.append(jnp.zeros((HIDDEN,), jnp.float32))

    stack = lambda xs: jnp.stack(xs, axis=0)
    return dict(word_emb=word_emb, pos_emb=pos_emb, rw_bias=rw_bias, rr_bias=rr_bias,
                final_w=final_w,
                w_k=stack(w_k), w_v=stack(w_v), w_q=stack(w_q), w_r=stack(w_r),
                w_o=stack(w_o),
                ln1_g=stack(ln1_g), ln1_b=stack(ln1_b),
                w1=stack(w1), b1=stack(b1), w2=stack(w2), b2=stack(b2),
                ln2_g=stack(ln2_g), ln2_b=stack(ln2_b))


if __name__ == "__main__":
    key = jax.random.PRNGKey(0)
    pkey, ikey = jax.random.split(key)
    params = init_params(pkey)

    bs, qs = 2, 8
    dec_input = jax.random.randint(ikey, (bs, qs), 1, VOCAB)
    dec_input_len = jnp.array([8, 5], dtype=jnp.int32)
    pad_pos = jnp.arange(qs)[None, :] >= dec_input_len[:, None]
    dec_input = jnp.where(pad_pos, PAD_IDX, dec_input)              # padded tokens = padding_index

    logits, mem = transformer_decoder_forward(params, dec_input, dec_input_len)
    logits = jax.block_until_ready(logits)

    assert logits.shape == (bs * (qs - 1), VOCAB)
    assert len(mem) == N_LAYERS and mem[0].shape == (bs, qs, HIDDEN)
    assert bool(jnp.all(jnp.isfinite(logits)))

    # numerical self-check against a pure-JAX implementation of the same reference math
    ref_logits, ref_mem = _reference_forward(params, dec_input, dec_input_len)
    assert bool(jnp.allclose(logits, ref_logits, rtol=2e-3, atol=2e-3))
    assert bool(jnp.allclose(mem[1], ref_mem[1], rtol=2e-3, atol=2e-3))

    print("KERNEL_OK")
</pallas_src>

<mosaic_0001>
module attributes {stable_mosaic.version = 11 : i64} {
  func.func @_fused_decoder_kernel(%arg0: memref<16x32xf32, #tpu.memory_space<vmem>>, %arg1: memref<8x32xf32, #tpu.memory_space<vmem>>, %arg2: memref<16x128xf32, #tpu.memory_space<vmem>>, %arg3: memref<128x16xf32, #tpu.memory_space<vmem>>, %arg4: memref<128x8xf32, #tpu.memory_space<vmem>>, %arg5: memref<2x5x32x32xf32, #tpu.memory_space<vmem>>, %arg6: memref<2x2x32x64xf32, #tpu.memory_space<vmem>>, %arg7: memref<2x8x32xf32, #tpu.memory_space<vmem>>, %arg8: memref<2x1x64xf32, #tpu.memory_space<vmem>>, %arg9: memref<32x128xf32, #tpu.memory_space<vmem>>, %arg10: memref<16x128xf32, #tpu.memory_space<vmem>>, %arg11: memref<2x16x32xf32, #tpu.memory_space<vmem>>) attributes {dimension_semantics = [], scalar_prefetch = 0 : i64, scratch_operands = 0 : i64, tpu.core_type = #tpu.core_type<tc>} {
    %c0 = arith.constant 0 : index
    %c0_0 = arith.constant 0 : index
    %0 = vector.load %arg0[%c0, %c0_0] : memref<16x32xf32, #tpu.memory_space<vmem>>, vector<16x32xf32>
    %c0_1 = arith.constant 0 : index
    %c0_2 = arith.constant 0 : index
    %1 = vector.load %arg1[%c0_1, %c0_2] : memref<8x32xf32, #tpu.memory_space<vmem>>, vector<8x32xf32>
    %c0_3 = arith.constant 0 : index
    %c0_4 = arith.constant 0 : index
    %2 = vector.load %arg2[%c0_3, %c0_4] : memref<16x128xf32, #tpu.memory_space<vmem>>, vector<16x128xf32>
    %c0_5 = arith.constant 0 : index
    %c0_6 = arith.constant 0 : index
    %3 = vector.load %arg3[%c0_5, %c0_6] : memref<128x16xf32, #tpu.memory_space<vmem>>, vector<128x16xf32>
    %c0_7 = arith.constant 0 : index
    %c0_8 = arith.constant 0 : index
    %4 = vector.load %arg4[%c0_7, %c0_8] : memref<128x8xf32, #tpu.memory_space<vmem>>, vector<128x8xf32>
    %5 = tpu.iota {dimensions = array<i32: 1>} : vector<1x32xi32>
    %c0_i32 = arith.constant 0 : i32
    %6 = vector.broadcast %c0_i32 : i32 to vector<1x32xi32>
    %7 = arith.cmpi sge, %5, %6 : vector<1x32xi32>
    %c16_i32 = arith.constant 16 : i32
    %8 = vector.broadcast %c16_i32 : i32 to vector<1x32xi32>
    %9 = arith.cmpi slt, %5, %8 : vector<1x32xi32>
    %10 = arith.andi %7, %9 : vector<1x32xi1>
    %11 = arith.extui %10 : vector<1x32xi1> to vector<1x32xi32>
    %12 = arith.sitofp %11 : vector<1x32xi32> to vector<1x32xf32>
    %c16_i32_9 = arith.constant 16 : i32
    %13 = vector.broadcast %c16_i32_9 : i32 to vector<1x32xi32>
    %14 = arith.cmpi sge, %5, %13 : vector<1x32xi32>
    %c32_i32 = arith.constant 32 : i32
    %15 = vector.broadcast %c32_i32 : i32 to vector<1x32xi32>
    %16 = arith.cmpi slt, %5, %15 : vector<1x32xi32>
    %17 = arith.andi %14, %16 : vector<1x32xi1>
    %18 = arith.extui %17 : vector<1x32xi1> to vector<1x32xi32>
    %19 = arith.sitofp %18 : vector<1x32xi32> to vector<1x32xf32>
    %c0_10 = arith.constant 0 : index
    %c0_11 = arith.constant 0 : index
    %c0_12 = arith.constant 0 : index
    %20 = vector.load %arg11[%c0_10, %c0_11, %c0_12] : memref<2x16x32xf32, #tpu.memory_space<vmem>>, vector<1x16x32xf32>
    %21 = vector.shape_cast %20 : vector<1x16x32xf32> to vector<16x32xf32>
    %22 = vector.shape_cast %0 : vector<16x32xf32> to vector<1x16x32xf32>
    tpu.vector_store %arg11[%c0_10, %c0_11, %c0_12], %22 {strides = array<i32>} : memref<2x16x32xf32, #tpu.memory_space<vmem>>, vector<1x16x32xf32>,
    %c0_13 = arith.constant 0 : index
    %c0_14 = arith.constant 0 : index
    %c0_15 = arith.constant 0 : index
    %23 = vector.load %arg7[%c0_13, %c0_14, %c0_15] : memref<2x8x32xf32, #tpu.memory_space<vmem>>, vector<1x8x32xf32>
    %24 = vector.shape_cast %23 : vector<1x8x32xf32> to vector<8x32xf32>
    %c0_16 = arith.constant 0 : index
    %c0_17 = arith.constant 0 : index
    %c0_18 = arith.constant 0 : index
    %25 = vector.load %arg8[%c0_16, %c0_17, %c0_18] : memref<2x1x64xf32, #tpu.memory_space<vmem>>, vector<1x1x64xf32>
    %26 = vector.shape_cast %25 : vector<1x1x64xf32> to vector<1x64xf32>
    %c0_19 = arith.constant 0 : index
    %c0_20 = arith.constant 0 : index
    %c0_21 = arith.constant 0 : index
    %c0_22 = arith.constant 0 : index
    %27 = vector.load %arg5[%c0_19, %c0_20, %c0_21, %c0_22] : memref<2x5x32x32xf32, #tpu.memory_space<vmem>>, vector<1x1x32x32xf32>
    %28 = vector.shape_cast %27 : vector<1x1x32x32xf32> to vector<32x32xf32>
    %cst = arith.constant dense<0.000000e+00> : vector<16x32xf32>
    %29 = tpu.matmul %0, %28, %cst {dimension_numbers = #tpu.dot_dimension_numbers<[1], [0], [0], [1], [0, 0, 1, 1], [], []>} : vector<16x32xf32>, vector<32x32xf32>, vector<16x32xf32> -> vector<16x32xf32>
    %c0_23 = arith.constant 0 : index
    %c1 = arith.constant 1 : index
    %c0_24 = arith.constant 0 : index
    %c0_25 = arith.constant 0 : index
    %30 = vector.load %arg5[%c0_23, %c1, %c0_24, %c0_25] : memref<2x5x32x32xf32, #tpu.memory_space<vmem>>, vector<1x1x32x32xf32>
    %31 = vector.shape_cast %30 : vector<1x1x32x32xf32> to vector<32x32xf32>
    %cst_26 = arith.constant dense<0.000000e+00> : vector<16x32xf32>
    %32 = tpu.matmul %0, %31, %cst_26 {dimension_numbers = #tpu.dot_dimension_numbers<[1], [0], [0], [1], [0, 0, 1, 1], [], []>} : vector<16x32xf32>, vector<32x32xf32>, vector<16x32xf32> -> vector<16x32xf32>
    %c0_27 = arith.constant 0 : index
    %c2 = arith.constant 2 : index
    %c0_28 = arith.constant 0 : index
    %c0_29 = arith.constant 0 : index
    %33 = vector.load %arg5[%c0_27, %c2, %c0_28, %c0_29] : memref<2x5x32x32xf32, #tpu.memory_space<vmem>>, vector<1x1x32x32xf32>
    %34 = vector.shape_cast %33 : vector<1x1x32x32xf32> to vector<32x32xf32>
    %cst_30 = arith.constant dense<0.000000e+00> : vector<16x32xf32>
    %35 = tpu.matmul %0, %34, %cst_30 {dimension_numbers = #tpu.dot_dimension_numbers<[1], [0], [0], [1], [0, 0, 1, 1], [], []>} : vector<16x32xf32>, vector<32x32xf32>, vector<16x32xf32> -> vector<16x32xf32>
    %c0_31 = arith.constant 0 : index
    %c3 = arith.constant 3 : index
    %c0_32 = arith.constant 0 : index
    %c0_33 = arith.constant 0 : index
    %36 = vector.load %arg5[%c0_31, %c3, %c0_32, %c0_33] : memref<2x5x32x32xf32, #tpu.memory_space<vmem>>, vector<1x1x32x32xf32>
    %37 = vector.shape_cast %36 : vector<1x1x32x32xf32> to vector<32x32xf32>
    %cst_34 = arith.constant dense<0.000000e+00> : vector<8x32xf32>
    %38 = tpu.matmul %1, %37, %cst_34 {dimension_numbers = #tpu.dot_dimension_numbers<[1], [0], [0], [1], [0, 0, 1, 1], [], []>} : vector<8x32xf32>, vector<32x32xf32>, vector<8x32xf32> -> vector<8x32xf32>
    %39 = vector.extract_strided_slice %24 {offsets = [5, 0], sizes = [1, 32], strides = [1, 1]} : vector<8x32xf32> to vector<1x32xf32>
    %40 = vector.broadcast %39 : vector<1x32xf32> to vector<16x32xf32>
    %41 = arith.addf %35, %40 : vector<16x32xf32>
    %42 = vector.extract_strided_slice %24 {offsets = [6, 0], sizes = [1, 32], strides = [1, 1]} : vector<8x32xf32> to vector<1x32xf32>
    %43 = vector.broadcast %42 : vector<1x32xf32> to vector<16x32xf32>
    %44 = arith.addf %35, %43 : vector<16x32xf32>
    %cst_35 = arith.constant dense<0.000000e+00> : vector<128x32xf32>
    %45 = tpu.matmul %3, %29, %cst_35 {dimension_numbers = #tpu.dot_dimension_numbers<[1], [0], [0], [1], [0, 0, 1, 1], [], []>} : vector<128x16xf32>, vector<16x32xf32>, vector<128x32xf32> -> vector<128x32xf32>
    %cst_36 = arith.constant dense<0.000000e+00> : vector<128x32xf32>
    %46 = tpu.matmul %3, %32, %cst_36 {dimension_numbers = #tpu.dot_dimension_numbers<[1], [0], [0], [1], [0, 0, 1, 1], [], []>} : vector<128x16xf32>, vector<16x32xf32>, vector<128x32xf32> -> vector<128x32xf32>
    %cst_37 = arith.constant dense<0.000000e+00> : vector<128x32xf32>
    %47 = tpu.matmul %4, %38, %cst_37 {dimension_numbers = #tpu.dot_dimension_numbers<[1], [0], [0], [1], [0, 0, 1, 1], [], []>} : vector<128x8xf32>, vector<8x32xf32>, vector<128x32xf32> -> vector<128x32xf32>
    %cst_38 = arith.constant 0.000000e+00 : f32
    %48 = vector.broadcast %cst_38 : f32 to vector<16x32xf32>
    %49 = vector.broadcast %12 : vector<1x32xf32> to vector<16x32xf32>
    %50 = arith.mulf %41, %49 : vector<16x32xf32>
    %cst_39 = arith.constant dense<0.000000e+00> : vector<16x128xf32>
    %51 = tpu.matmul %50, %45, %cst_39 {dimension_numbers = #tpu.dot_dimension_numbers<[1], [1], [0], [0], [0, 0, 1, 0], [], []>} : vector<16x32xf32>, vector<128x32xf32>, vector<16x128xf32> -> vector<16x128xf32>
    %52 = vector.broadcast %12 : vector<1x32xf32> to vector<16x32xf32>
    %53 = arith.mulf %44, %52 : vector<16x32xf32>
    %cst_40 = arith.constant dense<0.000000e+00> : vector<16x128xf32>
    %54 = tpu.matmul %53, %47, %cst_40 {dimension_numbers = #tpu.dot_dimension_numbers<[1], [1], [0], [0], [0, 0, 1, 0], [], []>} : vector<16x32xf32>, vector<128x32xf32>, vector<16x128xf32> -> vector<16x128xf32>
    %55 = arith.addf %51, %54 : vector<16x128xf32>
    %56 = arith.addf %55, %2 : vector<16x128xf32>
    %cst_41 = arith.constant dense<0xFF800000> : vector<16xf32>
    %57 = vector.multi_reduction <maximumf>, %56, %cst_41 [1] : vector<16x128xf32> to vector<16xf32>
    %58 = vector.shape_cast %57 : vector<16xf32> to vector<16x1xf32>
    %59 = vector.broadcast %58 : vector<16x1xf32> to vector<16x128xf32>
    %60 = arith.subf %56, %59 : vector<16x128xf32>
    %61 = math.exp %60 : vector<16x128xf32>
    %cst_42 = arith.constant dense<0.000000e+00> : vector<16xf32>
    %62 = vector.multi_reduction <add>, %61, %cst_42 [1] : vector<16x128xf32> to vector<16xf32>
    %63 = vector.shape_cast %62 : vector<16xf32> to vector<16x1xf32>
    %64 = tpu.reciprocal %63 {approx = true} : vector<16x1xf32> -> vector<16x1xf32>
    %65 = vector.broadcast %64 : vector<16x1xf32> to vector<16x128xf32>
    %66 = arith.mulf %61, %65 : vector<16x128xf32>
    %cst_43 = arith.constant dense<0.000000e+00> : vector<16x32xf32>
    %67 = tpu.matmul %66, %46, %cst_43 {dimension_numbers = #tpu.dot_dimension_numbers<[1], [0], [0], [1], [0, 0, 1, 1], [], []>} : vector<16x128xf32>, vector<128x32xf32>, vector<16x32xf32> -> vector<16x32xf32>
    %68 = vector.broadcast %12 : vector<1x32xf32> to vector<16x32xf32>
    %69 = arith.mulf %67, %68 : vector<16x32xf32>
    %70 = arith.addf %48, %69 : vector<16x32xf32>
    %71 = vector.broadcast %19 : vector<1x32xf32> to vector<16x32xf32>
    %72 = arith.mulf %41, %71 : vector<16x32xf32>
    %cst_44 = arith.constant dense<0.000000e+00> : vector<16x128xf32>
    %73 = tpu.matmul %72, %45, %cst_44 {dimension_numbers = #tpu.dot_dimension_numbers<[1], [1], [0], [0], [0, 0, 1, 0], [], []>} : vector<16x32xf32>, vector<128x32xf32>, vector<16x128xf32> -> vector<16x128xf32>
    %74 = vector.broadcast %19 : vector<1x32xf32> to vector<16x32xf32>
    %75 = arith.mulf %44, %74 : vector<16x32xf32>
    %cst_45 = arith.constant dense<0.000000e+00> : vector<16x128xf32>
    %76 = tpu.matmul %75, %47, %cst_45 {dimension_numbers = #tpu.dot_dimension_numbers<[1], [1], [0], [0], [0, 0, 1, 0], [], []>} : vector<16x32xf32>, vector<128x32xf32>, vector<16x128xf32> -> vector<16x128xf32>
    %77 = arith.addf %73, %76 : vector<16x128xf32>
    %78 = arith.addf %77, %2 : vector<16x128xf32>
    %cst_46 = arith.constant dense<0xFF800000> : vector<16xf32>
    %79 = vector.multi_reduction <maximumf>, %78, %cst_46 [1] : vector<16x128xf32> to vector<16xf32>
    %80 = vector.shape_cast %79 : vector<16xf32> to vector<16x1xf32>
    %81 = vector.broadcast %80 : vector<16x1xf32> to vector<16x128xf32>
    %82 = arith.subf %78, %81 : vector<16x128xf32>
    %83 = math.exp %82 : vector<16x128xf32>
    %cst_47 = arith.constant dense<0.000000e+00> : vector<16xf32>
    %84 = vector.multi_reduction <add>, %83, %cst_47 [1] : vector<16x128xf32> to vector<16xf32>
    %85 = vector.shape_cast %84 : vector<16xf32> to vector<16x1xf32>
    %86 = tpu.reciprocal %85 {approx = true} : vector<16x1xf32> -> vector<16x1xf32>
    %87 = vector.broadcast %86 : vector<16x1xf32> to vector<16x128xf32>
    %88 = arith.mulf %83, %87 : vector<16x128xf32>
    %cst_48 = arith.constant dense<0.000000e+00> : vector<16x32xf32>
    %89 = tpu.matmul %88, %46, %cst_48 {dimension_numbers = #tpu.dot_dimension_numbers<[1], [0], [0], [1], [0, 0, 1, 1], [], []>} : vector<16x128xf32>, vector<128x32xf32>, vector<16x32xf32> -> vector<16x32xf32>
    %90 = vector.broadcast %19 : vector<1x32xf32> to vector<16x32xf32>
    %91 = arith.mulf %89, %90 : vector<16x32xf32>
    %92 = arith.addf %70, %91 : vector<16x32xf32>
    %c0_49 = arith.constant 0 : index
    %c4 = arith.constant 4 : index
    %c0_50 = arith.constant 0 : index
    %c0_51 = arith.constant 0 : index
    %93 = vector.load %arg5[%c0_49, %c4, %c0_50, %c0_51] : memref<2x5x32x32xf32, #tpu.memory_space<vmem>>, vector<1x1x32x32xf32>
    %94 = vector.shape_cast %93 : vector<1x1x32x32xf32> to vector<32x32xf32>
    %cst_52 = arith.constant dense<0.000000e+00> : vector<16x32xf32>
    %95 = tpu.matmul %92, %94, %cst_52 {dimension_numbers = #tpu.dot_dimension_numbers<[1], [0], [0], [1], [0, 0, 1, 1], [], []>} : vector<16x32xf32>, vector<32x32xf32>, vector<16x32xf32> -> vector<16x32xf32>
    %96 = arith.addf %0, %95 : vector<16x32xf32>
    %97 = vector.extract_strided_slice %24 {offsets = [0, 0], sizes = [1, 32], strides = [1, 1]} : vector<8x32xf32> to vector<1x32xf32>
    %98 = vector.extract_strided_slice %24 {offsets = [1, 0], sizes = [1, 32], strides = [1, 1]} : vector<8x32xf32> to vector<1x32xf32>
    %cst_53 = arith.constant dense<0.000000e+00> : vector<16xf32>
    %99 = vector.multi_reduction <add>, %96, %cst_53 [1] : vector<16x32xf32> to vector<16xf32>
    %100 = vector.shape_cast %99 : vector<16xf32> to vector<16x1xf32>
    %cst_54 = arith.constant 3.200000e+01 : f32
    %101 = vector.broadcast %cst_54 : f32 to vector<16x1xf32>
    %102 = arith.divf %100, %101 : vector<16x1xf32>
    %103 = vector.broadcast %102 : vector<16x1xf32> to vector<16x32xf32>
    %104 = arith.subf %96, %103 : vector<16x32xf32>
    %105 = arith.mulf %104, %104 : vector<16x32xf32>
    %cst_55 = arith.constant dense<0.000000e+00> : vector<16xf32>
    %106 = vector.multi_reduction <add>, %105, %cst_55 [1] : vector<16x32xf32> to vector<16xf32>
    %107 = vector.shape_cast %106 : vector<16xf32> to vector<16x1xf32>
    %cst_56 = arith.constant 3.200000e+01 : f32
    %108 = vector.broadcast %cst_56 : f32 to vector<16x1xf32>
    %109 = arith.divf %107, %108 : vector<16x1xf32>
    %110 = vector.broadcast %102 : vector<16x1xf32> to vector<16x32xf32>
    %111 = arith.subf %96, %110 : vector<16x32xf32>
    %cst_57 = arith.constant 9.99999974E-6 : f32
    %112 = vector.broadcast %cst_57 : f32 to vector<16x1xf32>
    %113 = arith.addf %109, %112 : vector<16x1xf32>
    %114 = math.rsqrt %113 : vector<16x1xf32>
    %115 = vector.broadcast %114 : vector<16x1xf32> to vector<16x32xf32>
    %116 = arith.mulf %111, %115 : vector<16x32xf32>
    %117 = vector.broadcast %97 : vector<1x32xf32> to vector<16x32xf32>
    %118 = arith.mulf %116, %117 : vector<16x32xf32>
    %119 = vector.broadcast %98 : vector<1x32xf32> to vector<16x32xf32>
    %120 = arith.addf %118, %119 : vector<16x32xf32>
    %c0_58 = arith.constant 0 : index
    %c0_59 = arith.constant 0 : index
    %c0_60 = arith.constant 0 : index
    %c0_61 = arith.constant 0 : index
    %121 = vector.load %arg6[%c0_58, %c0_59, %c0_60, %c0_61] : memref<2x2x32x64xf32, #tpu.memory_space<vmem>>, vector<1x1x32x64xf32>
    %122 = vector.shape_cast %121 : vector<1x1x32x64xf32> to vector<32x64xf32>
    %cst_62 = arith.constant dense<0.000000e+00> : vector<16x64xf32>
    %123 = tpu.matmul %120, %122, %cst_62 {dimension_numbers = #tpu.dot_dimension_numbers<[1], [0], [0], [1], [0, 0, 1, 1], [], []>} : vector<16x32xf32>, vector<32x64xf32>, vector<16x64xf32> -> vector<16x64xf32>
    %124 = vector.broadcast %26 : vector<1x64xf32> to vector<16x64xf32>
    %125 = arith.addf %123, %124 : vector<16x64xf32>
    %cst_63 = arith.constant 0.000000e+00 : f32
    %126 = vector.broadcast %cst_63 : f32 to vector<16x64xf32>
    %127 = arith.maximumf %125, %126 : vector<16x64xf32>
    %c0_64 = arith.constant 0 : index
    %c1_65 = arith.constant 1 : index
    %c0_66 = arith.constant 0 : index
    %c0_67 = arith.constant 0 : index
    %128 = vector.load %arg6[%c0_64, %c1_65, %c0_66, %c0_67] : memref<2x2x32x64xf32, #tpu.memory_space<vmem>>, vector<1x1x32x64xf32>
    %129 = vector.shape_cast %128 : vector<1x1x32x64xf32> to vector<32x64xf32>
    %cst_68 = arith.constant dense<0.000000e+00> : vector<16x32xf32>
    %130 = tpu.matmul %127, %129, %cst_68 {dimension_numbers = #tpu.dot_dimension_numbers<[1], [1], [0], [0], [0, 0, 1, 0], [], []>} : vector<16x64xf32>, vector<32x64xf32>, vector<16x32xf32> -> vector<16x32xf32>
    %131 = vector.extract_strided_slice %24 {offsets = [4, 0], sizes = [1, 32], strides = [1, 1]} : vector<8x32xf32> to vector<1x32xf32>
    %132 = vector.broadcast %131 : vector<1x32xf32> to vector<16x32xf32>
    %133 = arith.addf %130, %132 : vector<16x32xf32>
    %134 = arith.addf %120, %133 : vector<16x32xf32>
    %135 = vector.extract_strided_slice %24 {offsets = [2, 0], sizes = [1, 32], strides = [1, 1]} : vector<8x32xf32> to vector<1x32xf32>
    %136 = vector.extract_strided_slice %24 {offsets = [3, 0], sizes = [1, 32], strides = [1, 1]} : vector<8x32xf32> to vector<1x32xf32>
    %cst_69 = arith.constant dense<0.000000e+00> : vector<16xf32>
    %137 = vector.multi_reduction <add>, %134, %cst_69 [1] : vector<16x32xf32> to vector<16xf32>
    %138 = vector.shape_cast %137 : vector<16xf32> to vector<16x1xf32>
    %cst_70 = arith.constant 3.200000e+01 : f32
    %139 = vector.broadcast %cst_70 : f32 to vector<16x1xf32>
    %140 = arith.divf %138, %139 : vector<16x1xf32>
    %141 = vector.broadcast %140 : vector<16x1xf32> to vector<16x32xf32>
    %142 = arith.subf %134, %141 : vector<16x32xf32>
    %143 = arith.mulf %142, %142 : vector<16x32xf32>
    %cst_71 = arith.constant dense<0.000000e+00> : vector<16xf32>
    %144 = vector.multi_reduction <add>, %143, %cst_71 [1] : vector<16x32xf32> to vector<16xf32>
    %145 = vector.shape_cast %144 : vector<16xf32> to vector<16x1xf32>
    %cst_72 = arith.constant 3.200000e+01 : f32
    %146 = vector.broadcast %cst_72 : f32 to vector<16x1xf32>
    %147 = arith.divf %145, %146 : vector<16x1xf32>
    %148 = vector.broadcast %140 : vector<16x1xf32> to vector<16x32xf32>
    %149 = arith.subf %134, %148 : vector<16x32xf32>
    %cst_73 = arith.constant 9.99999974E-6 : f32
    %150 = vector.broadcast %cst_73 : f32 to vector<16x1xf32>
    %151 = arith.addf %147, %150 : vector<16x1xf32>
    %152 = math.rsqrt %151 : vector<16x1xf32>
    %153 = vector.broadcast %152 : vector<16x1xf32> to vector<16x32xf32>
    %154 = arith.mulf %149, %153 : vector<16x32xf32>
    %155 = vector.broadcast %135 : vector<1x32xf32> to vector<16x32xf32>
    %156 = arith.mulf %154, %155 : vector<16x32xf32>
    %157 = vector.broadcast %136 : vector<1x32xf32> to vector<16x32xf32>
    %158 = arith.addf %156, %157 : vector<16x32xf32>
    %c1_74 = arith.constant 1 : index
    %c0_75 = arith.constant 0 : index
    %c0_76 = arith.constant 0 : index
    %159 = vector.load %arg11[%c1_74, %c0_75, %c0_76] : memref<2x16x32xf32, #tpu.memory_space<vmem>>, vector<1x16x32xf32>
    %160 = vector.shape_cast %159 : vector<1x16x32xf32> to vector<16x32xf32>
    %161 = vector.shape_cast %158 : vector<16x32xf32> to vector<1x16x32xf32>
    tpu.vector_store %arg11[%c1_74, %c0_75, %c0_76], %161 {strides = array<i32>} : memref<2x16x32xf32, #tpu.memory_space<vmem>>, vector<1x16x32xf32>,
    %c1_77 = arith.constant 1 : index
    %c0_78 = arith.constant 0 : index
    %c0_79 = arith.constant 0 : index
    %162 = vector.load %arg7[%c1_77, %c0_78, %c0_79] : memref<2x8x32xf32, #tpu.memory_space<vmem>>, vector<1x8x32xf32>
    %163 = vector.shape_cast %162 : vector<1x8x32xf32> to vector<8x32xf32>
    %c1_80 = arith.constant 1 : index
    %c0_81 = arith.constant 0 : index
    %c0_82 = arith.constant 0 : index
    %164 = vector.load %arg8[%c1_80, %c0_81, %c0_82] : memref<2x1x64xf32, #tpu.memory_space<vmem>>, vector<1x1x64xf32>
    %165 = vector.shape_cast %164 : vector<1x1x64xf32> to vector<1x64xf32>
    %c1_83 = arith.constant 1 : index
    %c0_84 = arith.constant 0 : index
    %c0_85 = arith.constant 0 : index
    %c0_86 = arith.constant 0 : index
    %166 = vector.load %arg5[%c1_83, %c0_84, %c0_85, %c0_86] : memref<2x5x32x32xf32, #tpu.memory_space<vmem>>, vector<1x1x32x32xf32>
    %167 = vector.shape_cast %166 : vector<1x1x32x32xf32> to vector<32x32xf32>
    %cst_87 = arith.constant dense<0.000000e+00> : vector<16x32xf32>
    %168 = tpu.matmul %158, %167, %cst_87 {dimension_numbers = #tpu.dot_dimension_numbers<[1], [0], [0], [1], [0, 0, 1, 1], [], []>} : vector<16x32xf32>, vector<32x32xf32>, vector<16x32xf32> -> vector<16x32xf32>
    %c1_88 = arith.constant 1 : index
    %c1_89 = arith.constant 1 : index
    %c0_90 = arith.constant 0 : index
    %c0_91 = arith.constant 0 : index
    %169 = vector.load %arg5[%c1_88, %c1_89, %c0_90, %c0_91] : memref<2x5x32x32xf32, #tpu.memory_space<vmem>>, vector<1x1x32x32xf32>
    %170 = vector.shape_cast %169 : vector<1x1x32x32xf32> to vector<32x32xf32>
    %cst_92 = arith.constant dense<0.000000e+00> : vector<16x32xf32>
    %171 = tpu.matmul %158, %170, %cst_92 {dimension_numbers = #tpu.dot_dimension_numbers<[1], [0], [0], [1], [0, 0, 1, 1], [], []>} : vector<16x32xf32>, vector<32x32xf32>, vector<16x32xf32> -> vector<16x32xf32>
    %c1_93 = arith.constant 1 : index
    %c2_94 = arith.constant 2 : index
    %c0_95 = arith.constant 0 : index
    %c0_96 = arith.constant 0 : index
    %172 = vector.load %arg5[%c1_93, %c2_94, %c0_95, %c0_96] : memref<2x5x32x32xf32, #tpu.memory_space<vmem>>, vector<1x1x32x32xf32>
    %173 = vector.shape_cast %172 : vector<1x1x32x32xf32> to vector<32x32xf32>
    %cst_97 = arith.constant dense<0.000000e+00> : vector<16x32xf32>
    %174 = tpu.matmul %158, %173, %cst_97 {dimension_numbers = #tpu.dot_dimension_numbers<[1], [0], [0], [1], [0, 0, 1, 1], [], []>} : vector<16x32xf32>, vector<32x32xf32>, vector<16x32xf32> -> vector<16x32xf32>
    %c1_98 = arith.constant 1 : index
    %c3_99 = arith.constant 3 : index
    %c0_100 = arith.constant 0 : index
    %c0_101 = arith.constant 0 : index
    %175 = vector.load %arg5[%c1_98, %c3_99, %c0_100, %c0_101] : memref<2x5x32x32xf32, #tpu.memory_space<vmem>>, vector<1x1x32x32xf32>
    %176 = vector.shape_cast %175 : vector<1x1x32x32xf32> to vector<32x32xf32>
    %cst_102 = arith.constant dense<0.000000e+00> : vector<8x32xf32>
    %177 = tpu.matmul %1, %176, %cst_102 {dimension_numbers = #tpu.dot_dimension_numbers<[1], [0], [0], [1], [0, 0, 1, 1], [], []>} : vector<8x32xf32>, vector<32x32xf32>, vector<8x32xf32> -> vector<8x32xf32>
    %178 = vector.extract_strided_slice %163 {offsets = [5, 0], sizes = [1, 32], strides = [1, 1]} : vector<8x32xf32> to vector<1x32xf32>
    %179 = vector.broadcast %178 : vector<1x32xf32> to vector<16x32xf32>
    %180 = arith.addf %174, %179 : vector<16x32xf32>
    %181 = vector.extract_strided_slice %163 {offsets = [6, 0], sizes = [1, 32], strides = [1, 1]} : vector<8x32xf32> to vector<1x32xf32>
    %182 = vector.broadcast %181 : vector<1x32xf32> to vector<16x32xf32>
    %183 = arith.addf %174, %182 : vector<16x32xf32>
    %cst_103 = arith.constant dense<0.000000e+00> : vector<128x32xf32>
    %184 = tpu.matmul %3, %168, %cst_103 {dimension_numbers = #tpu.dot_dimension_numbers<[1], [0], [0], [1], [0, 0, 1, 1], [], []>} : vector<128x16xf32>, vector<16x32xf32>, vector<128x32xf32> -> vector<128x32xf32>
    %cst_104 = arith.constant dense<0.000000e+00> : vector<128x32xf32>
    %185 = tpu.matmul %3, %171, %cst_104 {dimension_numbers = #tpu.dot_dimension_numbers<[1], [0], [0], [1], [0, 0, 1, 1], [], []>} : vector<128x16xf32>, vector<16x32xf32>, vector<128x32xf32> -> vector<128x32xf32>
    %cst_105 = arith.constant dense<0.000000e+00> : vector<128x32xf32>
    %186 = tpu.matmul %4, %177, %cst_105 {dimension_numbers = #tpu.dot_dimension_numbers<[1], [0], [0], [1], [0, 0, 1, 1], [], []>} : vector<128x8xf32>, vector<8x32xf32>, vector<128x32xf32> -> vector<128x32xf32>
    %cst_106 = arith.constant 0.000000e+00 : f32
    %187 = vector.broadcast %cst_106 : f32 to vector<16x32xf32>
    %188 = vector.broadcast %12 : vector<1x32xf32> to vector<16x32xf32>
    %189 = arith.mulf %180, %188 : vector<16x32xf32>
    %cst_107 = arith.constant dense<0.000000e+00> : vector<16x128xf32>
    %190 = tpu.matmul %189, %184, %cst_107 {dimension_numbers = #tpu.dot_dimension_numbers<[1], [1], [0], [0], [0, 0, 1, 0], [], []>} : vector<16x32xf32>, vector<128x32xf32>, vector<16x128xf32> -> vector<16x128xf32>
    %191 = vector.broadcast %12 : vector<1x32xf32> to vector<16x32xf32>
    %192 = arith.mulf %183, %191 : vector<16x32xf32>
    %cst_108 = arith.constant dense<0.000000e+00> : vector<16x128xf32>
    %193 = tpu.matmul %192, %186, %cst_108 {dimension_numbers = #tpu.dot_dimension_numbers<[1], [1], [0], [0], [0, 0, 1, 0], [], []>} : vector<16x32xf32>, vector<128x32xf32>, vector<16x128xf32> -> vector<16x128xf32>
    %194 = arith.addf %190, %193 : vector<16x128xf32>
    %195 = arith.addf %194, %2 : vector<16x128xf32>
    %cst_109 = arith.constant dense<0xFF800000> : vector<16xf32>
    %196 = vector.multi_reduction <maximumf>, %195, %cst_109 [1] : vector<16x128xf32> to vector<16xf32>
    %197 = vector.shape_cast %196 : vector<16xf32> to vector<16x1xf32>
    %198 = vector.broadcast %197 : vector<16x1xf32> to vector<16x128xf32>
    %199 = arith.subf %195, %198 : vector<16x128xf32>
    %200 = math.exp %199 : vector<16x128xf32>
    %cst_110 = arith.constant dense<0.000000e+00> : vector<16xf32>
    %201 = vector.multi_reduction <add>, %200, %cst_110 [1] : vector<16x128xf32> to vector<16xf32>
    %202 = vector.shape_cast %201 : vector<16xf32> to vector<16x1xf32>
    %203 = tpu.reciprocal %202 {approx = true} : vector<16x1xf32> -> vector<16x1xf32>
    %204 = vector.broadcast %203 : vector<16x1xf32> to vector<16x128xf32>
    %205 = arith.mulf %200, %204 : vector<16x128xf32>
    %cst_111 = arith.constant dense<0.000000e+00> : vector<16x32xf32>
    %206 = tpu.matmul %205, %185, %cst_111 {dimension_numbers = #tpu.dot_dimension_numbers<[1], [0], [0], [1], [0, 0, 1, 1], [], []>} : vector<16x128xf32>, vector<128x32xf32>, vector<16x32xf32> -> vector<16x32xf32>
    %207 = vector.broadcast %12 : vector<1x32xf32> to vector<16x32xf32>
    %208 = arith.mulf %206, %207 : vector<16x32xf32>
    %209 = arith.addf %187, %208 : vector<16x32xf32>
    %210 = vector.broadcast %19 : vector<1x32xf32> to vector<16x32xf32>
    %211 = arith.mulf %180, %210 : vector<16x32xf32>
    %cst_112 = arith.constant dense<0.000000e+00> : vector<16x128xf32>
    %212 = tpu.matmul %211, %184, %cst_112 {dimension_numbers = #tpu.dot_dimension_numbers<[1], [1], [0], [0], [0, 0, 1, 0], [], []>} : vector<16x32xf32>, vector<128x32xf32>, vector<16x128xf32> -> vector<16x128xf32>
    %213 = vector.broadcast %19 : vector<1x32xf32> to vector<16x32xf32>
    %214 = arith.mulf %183, %213 : vector<16x32xf32>
    %cst_113 = arith.constant dense<0.000000e+00> : vector<16x128xf32>
    %215 = tpu.matmul %214, %186, %cst_113 {dimension_numbers = #tpu.dot_dimension_numbers<[1], [1], [0], [0], [0, 0, 1, 0], [], []>} : vector<16x32xf32>, vector<128x32xf32>, vector<16x128xf32> -> vector<16x128xf32>
    %216 = arith.addf %212, %215 : vector<16x128xf32>
    %217 = arith.addf %216, %2 : vector<16x128xf32>
    %cst_114 = arith.constant dense<0xFF800000> : vector<16xf32>
    %218 = vector.multi_reduction <maximumf>, %217, %cst_114 [1] : vector<16x128xf32> to vector<16xf32>
    %219 = vector.shape_cast %218 : vector<16xf32> to vector<16x1xf32>
    %220 = vector.broadcast %219 : vector<16x1xf32> to vector<16x128xf32>
    %221 = arith.subf %217, %220 : vector<16x128xf32>
    %222 = math.exp %221 : vector<16x128xf32>
    %cst_115 = arith.constant dense<0.000000e+00> : vector<16xf32>
    %223 = vector.multi_reduction <add>, %222, %cst_115 [1] : vector<16x128xf32> to vector<16xf32>
    %224 = vector.shape_cast %223 : vector<16xf32> to vector<16x1xf32>
    %225 = tpu.reciprocal %224 {approx = true} : vector<16x1xf32> -> vector<16x1xf32>
    %226 = vector.broadcast %225 : vector<16x1xf32> to vector<16x128xf32>
    %227 = arith.mulf %222, %226 : vector<16x128xf32>
    %cst_116 = arith.constant dense<0.000000e+00> : vector<16x32xf32>
    %228 = tpu.matmul %227, %185, %cst_116 {dimension_numbers = #tpu.dot_dimension_numbers<[1], [0], [0], [1], [0, 0, 1, 1], [], []>} : vector<16x128xf32>, vector<128x32xf32>, vector<16x32xf32> -> vector<16x32xf32>
    %229 = vector.broadcast %19 : vector<1x32xf32> to vector<16x32xf32>
    %230 = arith.mulf %228, %229 : vector<16x32xf32>
    %231 = arith.addf %209, %230 : vector<16x32xf32>
    %c1_117 = arith.constant 1 : index
    %c4_118 = arith.constant 4 : index
    %c0_119 = arith.constant 0 : index
    %c0_120 = arith.constant 0 : index
    %232 = vector.load %arg5[%c1_117, %c4_118, %c0_119, %c0_120] : memref<2x5x32x32xf32, #tpu.memory_space<vmem>>, vector<1x1x32x32xf32>
    %233 = vector.shape_cast %232 : vector<1x1x32x32xf32> to vector<32x32xf32>
    %cst_121 = arith.constant dense<0.000000e+00> : vector<16x32xf32>
    %234 = tpu.matmul %231, %233, %cst_121 {dimension_numbers = #tpu.dot_dimension_numbers<[1], [0], [0], [1], [0, 0, 1, 1], [], []>} : vector<16x32xf32>, vector<32x32xf32>, vector<16x32xf32> -> vector<16x32xf32>
    %235 = arith.addf %158, %234 : vector<16x32xf32>
    %236 = vector.extract_strided_slice %163 {offsets = [0, 0], sizes = [1, 32], strides = [1, 1]} : vector<8x32xf32> to vector<1x32xf32>
    %237 = vector.extract_strided_slice %163 {offsets = [1, 0], sizes = [1, 32], strides = [1, 1]} : vector<8x32xf32> to vector<1x32xf32>
    %cst_122 = arith.constant dense<0.000000e+00> : vector<16xf32>
    %238 = vector.multi_reduction <add>, %235, %cst_122 [1] : vector<16x32xf32> to vector<16xf32>
    %239 = vector.shape_cast %238 : vector<16xf32> to vector<16x1xf32>
    %cst_123 = arith.constant 3.200000e+01 : f32
    %240 = vector.broadcast %cst_123 : f32 to vector<16x1xf32>
    %241 = arith.divf %239, %240 : vector<16x1xf32>
    %242 = vector.broadcast %241 : vector<16x1xf32> to vector<16x32xf32>
    %243 = arith.subf %235, %242 : vector<16x32xf32>
    %244 = arith.mulf %243, %243 : vector<16x32xf32>
    %cst_124 = arith.constant dense<0.000000e+00> : vector<16xf32>
    %245 = vector.multi_reduction <add>, %244, %cst_124 [1] : vector<16x32xf32> to vector<16xf32>
    %246 = vector.shape_cast %245 : vector<16xf32> to vector<16x1xf32>
    %cst_125 = arith.constant 3.200000e+01 : f32
    %247 = vector.broadcast %cst_125 : f32 to vector<16x1xf32>
    %248 = arith.divf %246, %247 : vector<16x1xf32>
    %249 = vector.broadcast %241 : vector<16x1xf32> to vector<16x32xf32>
    %250 = arith.subf %235, %249 : vector<16x32xf32>
    %cst_126 = arith.constant 9.99999974E-6 : f32
    %251 = vector.broadcast %cst_126 : f32 to vector<16x1xf32>
    %252 = arith.addf %248, %251 : vector<16x1xf32>
    %253 = math.rsqrt %252 : vector<16x1xf32>
    %254 = vector.broadcast %253 : vector<16x1xf32> to vector<16x32xf32>
    %255 = arith.mulf %250, %254 : vector<16x32xf32>
    %256 = vector.broadcast %236 : vector<1x32xf32> to vector<16x32xf32>
    %257 = arith.mulf %255, %256 : vector<16x32xf32>
    %258 = vector.broadcast %237 : vector<1x32xf32> to vector<16x32xf32>
    %259 = arith.addf %257, %258 : vector<16x32xf32>
    %c1_127 = arith.constant 1 : index
    %c0_128 = arith.constant 0 : index
    %c0_129 = arith.constant 0 : index
    %c0_130 = arith.constant 0 : index
    %260 = vector.load %arg6[%c1_127, %c0_128, %c0_129, %c0_130] : memref<2x2x32x64xf32, #tpu.memory_space<vmem>>, vector<1x1x32x64xf32>
    %261 = vector.shape_cast %260 : vector<1x1x32x64xf32> to vector<32x64xf32>
    %cst_131 = arith.constant dense<0.000000e+00> : vector<16x64xf32>
    %262 = tpu.matmul %259, %261, %cst_131 {dimension_numbers = #tpu.dot_dimension_numbers<[1], [0], [0], [1], [0, 0, 1, 1], [], []>} : vector<16x32xf32>, vector<32x64xf32>, vector<16x64xf32> -> vector<16x64xf32>
    %263 = vector.broadcast %165 : vector<1x64xf32> to vector<16x64xf32>
    %264 = arith.addf %262, %263 : vector<16x64xf32>
    %cst_132 = arith.constant 0.000000e+00 : f32
    %265 = vector.broadcast %cst_132 : f32 to vector<16x64xf32>
    %266 = arith.maximumf %264, %265 : vector<16x64xf32>
    %c1_133 = arith.constant 1 : index
    %c1_134 = arith.constant 1 : index
    %c0_135 = arith.constant 0 : index
    %c0_136 = arith.constant 0 : index
    %267 = vector.load %arg6[%c1_133, %c1_134, %c0_135, %c0_136] : memref<2x2x32x64xf32, #tpu.memory_space<vmem>>, vector<1x1x32x64xf32>
    %268 = vector.shape_cast %267 : vector<1x1x32x64xf32> to vector<32x64xf32>
    %cst_137 = arith.constant dense<0.000000e+00> : vector<16x32xf32>
    %269 = tpu.matmul %266, %268, %cst_137 {dimension_numbers = #tpu.dot_dimension_numbers<[1], [1], [0], [0], [0, 0, 1, 0], [], []>} : vector<16x64xf32>, vector<32x64xf32>, vector<16x32xf32> -> vector<16x32xf32>
    %270 = vector.extract_strided_slice %163 {offsets = [4, 0], sizes = [1, 32], strides = [1, 1]} : vector<8x32xf32> to vector<1x32xf32>
    %271 = vector.broadcast %270 : vector<1x32xf32> to vector<16x32xf32>
    %272 = arith.addf %269, %271 : vector<16x32xf32>
    %273 = arith.addf %259, %272 : vector<16x32xf32>
    %274 = vector.extract_strided_slice %163 {offsets = [2, 0], sizes = [1, 32], strides = [1, 1]} : vector<8x32xf32> to vector<1x32xf32>
    %275 = vector.extract_strided_slice %163 {offsets = [3, 0], sizes = [1, 32], strides = [1, 1]} : vector<8x32xf32> to vector<1x32xf32>
    %cst_138 = arith.constant dense<0.000000e+00> : vector<16xf32>
    %276 = vector.multi_reduction <add>, %273, %cst_138 [1] : vector<16x32xf32> to vector<16xf32>
    %277 = vector.shape_cast %276 : vector<16xf32> to vector<16x1xf32>
    %cst_139 = arith.constant 3.200000e+01 : f32
    %278 = vector.broadcast %cst_139 : f32 to vector<16x1xf32>
    %279 = arith.divf %277, %278 : vector<16x1xf32>
    %280 = vector.broadcast %279 : vector<16x1xf32> to vector<16x32xf32>
    %281 = arith.subf %273, %280 : vector<16x32xf32>
    %282 = arith.mulf %281, %281 : vector<16x32xf32>
    %cst_140 = arith.constant dense<0.000000e+00> : vector<16xf32>
    %283 = vector.multi_reduction <add>, %282, %cst_140 [1] : vector<16x32xf32> to vector<16xf32>
    %284 = vector.shape_cast %283 : vector<16xf32> to vector<16x1xf32>
    %cst_141 = arith.constant 3.200000e+01 : f32
    %285 = vector.broadcast %cst_141 : f32 to vector<16x1xf32>
    %286 = arith.divf %284, %285 : vector<16x1xf32>
    %287 = vector.broadcast %279 : vector<16x1xf32> to vector<16x32xf32>
    %288 = arith.subf %273, %287 : vector<16x32xf32>
    %cst_142 = arith.constant 9.99999974E-6 : f32
    %289 = vector.broadcast %cst_142 : f32 to vector<16x1xf32>
    %290 = arith.addf %286, %289 : vector<16x1xf32>
    %291 = math.rsqrt %290 : vector<16x1xf32>
    %292 = vector.broadcast %291 : vector<16x1xf32> to vector<16x32xf32>
    %293 = arith.mulf %288, %292 : vector<16x32xf32>
    %294 = vector.broadcast %274 : vector<1x32xf32> to vector<16x32xf32>
    %295 = arith.mulf %293, %294 : vector<16x32xf32>
    %296 = vector.broadcast %275 : vector<1x32xf32> to vector<16x32xf32>
    %297 = arith.addf %295, %296 : vector<16x32xf32>
    %c0_143 = arith.constant 0 : index
    %c0_144 = arith.constant 0 : index
    %298 = vector.load %arg9[%c0_143, %c0_144] : memref<32x128xf32, #tpu.memory_space<vmem>>, vector<32x128xf32>
    %cst_145 = arith.constant dense<0.000000e+00> : vector<16x128xf32>
    %299 = tpu.matmul %297, %298, %cst_145 {dimension_numbers = #tpu.dot_dimension_numbers<[1], [0], [0], [1], [0, 0, 1, 1], [], []>} : vector<16x32xf32>, vector<32x128xf32>, vector<16x128xf32> -> vector<16x128xf32>
    %c0_146 = arith.constant 0 : index
    %c0_147 = arith.constant 0 : index
    %300 = vector.load %arg10[%c0_146, %c0_147] : memref<16x128xf32, #tpu.memory_space<vmem>>, vector<16x128xf32>
    tpu.vector_store %arg10[%c0_146, %c0_147], %299 {strides = array<i32>} : memref<16x128xf32, #tpu.memory_space<vmem>>, vector<16x128xf32>,
    return
  }
}

</mosaic_0001>

<llo_original>
// kernel: transformer_decoder_forward.1
$region0: #{transformer_decoder_forward.1}
  #allocation0 [shape = 'u32[]', space=smem, size = 0x4, offset = 0x4, fixed_abs, tag = 'smem constant byte address 0x4 - core index']
  #allocation1 [shape = 'u32[72,128]{1,0:T(1,128)}', space=vmem, size = 0x9000, scoped, tag = 'internal scratch']
  %s0 = inlined_call_operand.vmem [shape: f32[16,32], index: 0, kind: input, shape index: {}]
  %s1 = inlined_call_operand.vmem [shape: f32[8,32], index: 1, kind: input, shape index: {}]
  %s2 = inlined_call_operand.vmem [shape: f32[16,128], index: 2, kind: input, shape index: {}]
  %s3 = inlined_call_operand.vmem [shape: f32[128,16], index: 3, kind: input, shape index: {}]
  %s4 = inlined_call_operand.vmem [shape: f32[128,8], index: 4, kind: input, shape index: {}]
  %s5 = inlined_call_operand.vmem [shape: f32[2,5,32,32], index: 5, kind: input, shape index: {}]
  %s6 = inlined_call_operand.vmem [shape: f32[2,2,32,64], index: 6, kind: input, shape index: {}]
  %s7 = inlined_call_operand.vmem [shape: f32[2,8,32], index: 7, kind: input, shape index: {}]
  %s8 = inlined_call_operand.vmem [shape: f32[2,1,64], index: 8, kind: input, shape index: {}]
  %s9 = inlined_call_operand.vmem [shape: f32[32,128], index: 9, kind: input, shape index: {}]
  %s10 = inlined_call_operand.vmem [shape: f32[16,128], index: 10, kind: output, shape index: {0}]
  %s11 = inlined_call_operand.vmem [shape: f32[2,16,32], index: 11, kind: output, shape index: {1}]
  %12 = xla_tuple %s10, %s11
  %s13 = sld [smem:[#allocation0]]
  $region58: #{transformer_decoder_forward.1} parent=0
    _
  %s15 = ssub.s32 1, %s13
  %s16 = scalar_select 0, %s15, %s13
  // Predicated region
  $region2: #{transformer_decoder_forward.1} parent=0 // pred_check
    _
  $region3: #{transformer_decoder_forward.1} parent=0 // pred_check_branch
    %18 = sbr.rel (0) target = $region5
  $region4: #{transformer_decoder_forward.1} parent=0 // pred_region
    _
  $region5: #{transformer_decoder_forward.1} parent=0 // pred_fallthru
    _
  // Predicated region
  $region6: #{transformer_decoder_forward.1} parent=0 // pred_check
    _
  $region7: #{transformer_decoder_forward.1} parent=0 // pred_check_branch
    %20 = sbr.rel (0) target = $region9
  $region8: #{transformer_decoder_forward.1} parent=0 // pred_region
    _
  $region9: #{transformer_decoder_forward.1} parent=0 // pred_fallthru
    _
  // Predicated region
  $region10: #{transformer_decoder_forward.1} parent=0 // pred_check
    _
  $region11: #{transformer_decoder_forward.1} parent=0 // pred_check_branch
    %22 = sbr.rel (0) target = $region13
  $region12: #{transformer_decoder_forward.1} parent=0 // pred_region
    _
  $region13: #{transformer_decoder_forward.1} parent=0 // pred_fallthru
    _
  // Predicated region
  $region14: #{transformer_decoder_forward.1} parent=0 // pred_check
    _
  $region15: #{transformer_decoder_forward.1} parent=0 // pred_check_branch
    %24 = sbr.rel (0) target = $region17
  $region16: #{transformer_decoder_forward.1} parent=0 // pred_region
    _
  $region17: #{transformer_decoder_forward.1} parent=0 // pred_fallthru
    _
  // Predicated region
  $region18: #{transformer_decoder_forward.1} parent=0 // pred_check
    _
  $region19: #{transformer_decoder_forward.1} parent=0 // pred_check_branch
    %26 = sbr.rel (0) target = $region21
  $region20: #{transformer_decoder_forward.1} parent=0 // pred_region
    _
  $region21: #{transformer_decoder_forward.1} parent=0 // pred_fallthru
    _
  // Predicated region
  $region22: #{transformer_decoder_forward.1} parent=0 // pred_check
    _
  $region23: #{transformer_decoder_forward.1} parent=0 // pred_check_branch
    %28 = sbr.rel (0) target = $region25
  $region24: #{transformer_decoder_forward.1} parent=0 // pred_region
    _
  $region25: #{transformer_decoder_forward.1} parent=0 // pred_fallthru
    _
  // Predicated region
  $region26: #{transformer_decoder_forward.1} parent=0 // pred_check
    _
  $region27: #{transformer_decoder_forward.1} parent=0 // pred_check_branch
    %30 = sbr.rel (0) target = $region29
  $region28: #{transformer_decoder_forward.1} parent=0 // pred_region
    _
  $region29: #{transformer_decoder_forward.1} parent=0 // pred_fallthru
    _
  // Predicated region
  $region30: #{transformer_decoder_forward.1} parent=0 // pred_check
    _
  $region31: #{transformer_decoder_forward.1} parent=0 // pred_check_branch
    %32 = sbr.rel (0) target = $region33
  $region32: #{transformer_decoder_forward.1} parent=0 // pred_region
    _
  $region33: #{transformer_decoder_forward.1} parent=0 // pred_fallthru
    _
  // Predicated region
  $region34: #{transformer_decoder_forward.1} parent=0 // pred_check
    _
  $region35: #{transformer_decoder_forward.1} parent=0 // pred_check_branch
    %34 = sbr.rel (0) target = $region37
  $region36: #{transformer_decoder_forward.1} parent=0 // pred_region
    _
  $region37: #{transformer_decoder_forward.1} parent=0 // pred_fallthru
    _
  // Predicated region
  $region38: #{transformer_decoder_forward.1} parent=0 // pred_check
    _
  $region39: #{transformer_decoder_forward.1} parent=0 // pred_check_branch
    %36 = sbr.rel (0) target = $region41
  $region40: #{transformer_decoder_forward.1} parent=0 // pred_region
    _
  $region41: #{transformer_decoder_forward.1} parent=0 // pred_fallthru
    _
  %v37 = vld [vmem:[%s0] sm:$0xff]
  %v38 = vld [vmem:[%s0 + $0x8] sm:$0xff]
  %v39 = vld [vmem:[%s1] sm:$0xff]
  %v40 = vld [vmem:[%s2] sm:$0xff]
  %v41 = vld [vmem:[%s2 + $0x8] sm:$0xff]
  %v42 = vld [vmem:[%s3] sm:$0xff]
  %v43 = vld [vmem:[%s3 + $0x8] sm:$0xff]
  %v44 = vld [vmem:[%s3 + $0x10] sm:$0xff]
  %v45 = vld [vmem:[%s3 + $0x18] sm:$0xff]
  %v46 = vld [vmem:[%s3 + $0x20] sm:$0xff]
  %v47 = vld [vmem:[%s3 + $0x28] sm:$0xff]
  %v48 = vld [vmem:[%s3 + $0x30] sm:$0xff]
  %v49 = vld [vmem:[%s3 + $0x38] sm:$0xff]
  %v50 = vld [vmem:[%s3 + $0x40] sm:$0xff]
  %v51 = vld [vmem:[%s3 + $0x48] sm:$0xff]
  %v52 = vld [vmem:[%s3 + $0x50] sm:$0xff]
  %v53 = vld [vmem:[%s3 + $0x58] sm:$0xff]
  %v54 = vld [vmem:[%s3 + $0x60] sm:$0xff]
  %v55 = vld [vmem:[%s3 + $0x68] sm:$0xff]
  %v56 = vld [vmem:[%s3 + $0x70] sm:$0xff]
  %v57 = vld [vmem:[%s3 + $0x78] sm:$0xff]
  %v58 = vld [vmem:[%s4] sm:$0xff]
  %v59 = vld [vmem:[%s4 + $0x8] sm:$0xff]
  %v60 = vld [vmem:[%s4 + $0x10] sm:$0xff]
  %v61 = vld [vmem:[%s4 + $0x18] sm:$0xff]
  %v62 = vld [vmem:[%s4 + $0x20] sm:$0xff]
  %v63 = vld [vmem:[%s4 + $0x28] sm:$0xff]
  %v64 = vld [vmem:[%s4 + $0x30] sm:$0xff]
  %v65 = vld [vmem:[%s4 + $0x38] sm:$0xff]
  %v66 = vld [vmem:[%s4 + $0x40] sm:$0xff]
  %v67 = vld [vmem:[%s4 + $0x48] sm:$0xff]
  %v68 = vld [vmem:[%s4 + $0x50] sm:$0xff]
  %v69 = vld [vmem:[%s4 + $0x58] sm:$0xff]
  %v70 = vld [vmem:[%s4 + $0x60] sm:$0xff]
  %v71 = vld [vmem:[%s4 + $0x68] sm:$0xff]
  %v72 = vld [vmem:[%s4 + $0x70] sm:$0xff]
  %v73 = vld [vmem:[%s4 + $0x78] sm:$0xff]
  %v74 = vlaneseq
  %v75 = vand.u32 %v74, 127
  %vm76 = vcmp.ge.s32.totalorder %v75, 0
  %vm77 = vcmp.lt.s32.totalorder %v75, 16
  %vm78 = vmand %vm76, %vm77
  %v79 = vsel %vm78, 1, 0
  %v80 = vcvt.s32.f32 %v79
  %vm81 = vcmp.ge.s32.totalorder %v75, 16
  %vm82 = vcmp.lt.s32.totalorder %v75, 32
  %vm83 = vmand %vm81, %vm82
  %v84 = vsel %vm83, 1, 0
  %v85 = vcvt.s32.f32 %v84
  %vm86 = vcmask 261120
  %87 = vst.msk [vmem:[%s11] sm:$0xff] %vm86, %v37
  %88 = vst.msk [vmem:[%s11 + $0x8] sm:$0xff] %vm86, %v38
  %v89 = vld [vmem:[%s7] sm:$0xff]
  %v90 = vld [vmem:[%s8] sm:$0x1]
  %v91 = vld [vmem:[%s5] sm:$0xff]
  %v92 = vld [vmem:[%s5 + $0x8] sm:$0xff]
  %v93 = vld [vmem:[%s5 + $0x10] sm:$0xff]
  %v94 = vld [vmem:[%s5 + $0x18] sm:$0xff]
  %v96 = vsel %vm86, %v37, 0
  %v99 = vsel %vm86, %v38, 0
  %101 = vmatpush.msra.mxu0 0.0
  %102 = vmatpush.msra.mxu0 0.0
  %103 = vmatpush.msra.mxu0 0.0
  %104 = vmatpush.msra.mxu0 0.0
  %105 = vmatpush.msra.mxu0 0.0
  %106 = vmatpush.msra.mxu0 0.0
  %107 = vmatpush.msra.mxu0 0.0
  %108 = vmatpush.msra.mxu0 0.0
  %109 = vmatpush.msra.mxu0 0.0
  %110 = vmatpush.msra.mxu0 0.0
  %111 = vmatpush.msra.mxu0 0.0
  %112 = vmatpush.msra.mxu0 0.0
  %113 = vmatpush.msra.mxu0 %v94
  %114 = vmatpush.msra.mxu0 %v93
  %115 = vmatpush.msra.mxu0 %v92
  %116 = vmatpush.msra.mxu0 %v91
  %117 = vmatmul.f32.gmra.mxu0 %v96
  %v118 = vpop.f32.mrf.mxu0
  %v119 = vadd.f32 0.0, %v118
  %120 = vmatmul.f32.gmra.mxu0 %v99
  %v121 = vpop.f32.mrf.mxu0
  %v122 = vadd.f32 0.0, %v121
  %123 = vdwg.mxu0
  %s124 = scalar_lea.vmem %s5, 32
  %v125 = vld [vmem:[%s124] sm:$0xff]
  %v126 = vld [vmem:[%s124 + $0x8] sm:$0xff]
  %v127 = vld [vmem:[%s124 + $0x10] sm:$0xff]
  %v128 = vld [vmem:[%s124 + $0x18] sm:$0xff]
  %129 = vmatpush.msra.mxu0 0.0
  %130 = vmatpush.msra.mxu0 0.0
  %131 = vmatpush.msra.mxu0 0.0
  %132 = vmatpush.msra.mxu0 0.0
  %133 = vmatpush.msra.mxu0 0.0
  %134 = vmatpush.msra.mxu0 0.0
  %135 = vmatpush.msra.mxu0 0.0
  %136 = vmatpush.msra.mxu0 0.0
  %137 = vmatpush.msra.mxu0 0.0
  %138 = vmatpush.msra.mxu0 0.0
  %139 = vmatpush.msra.mxu0 0.0
  %140 = vmatpush.msra.mxu0 0.0
  %141 = vmatpush.msra.mxu0 %v128
  %142 = vmatpush.msra.mxu0 %v127
  %143 = vmatpush.msra.mxu0 %v126
  %144 = vmatpush.msra.mxu0 %v125
  %145 = vmatmul.f32.gmra.mxu0 %v96
  %v146 = vpop.f32.mrf.mxu0
  %v147 = vadd.f32 0.0, %v146
  %148 = vmatmul.f32.gmra.mxu0 %v99
  %v149 = vpop.f32.mrf.mxu0
  %v150 = vadd.f32 0.0, %v149
  %151 = vdwg.mxu0
  %s152 = scalar_lea.vmem %s5, 64
  %v153 = vld [vmem:[%s152] sm:$0xff]
  %v154 = vld [vmem:[%s152 + $0x8] sm:$0xff]
  %v155 = vld [vmem:[%s152 + $0x10] sm:$0xff]
  %v156 = vld [vmem:[%s152 + $0x18] sm:$0xff]
  %157 = vmatpush.msra.mxu0 0.0
  %158 = vmatpush.msra.mxu0 0.0
  %159 = vmatpush.msra.mxu0 0.0
  %160 = vmatpush.msra.mxu0 0.0
  %161 = vmatpush.msra.mxu0 0.0
  %162 = vmatpush.msra.mxu0 0.0
  %163 = vmatpush.msra.mxu0 0.0
  %164 = vmatpush.msra.mxu0 0.0
  %165 = vmatpush.msra.mxu0 0.0
  %166 = vmatpush.msra.mxu0 0.0
  %167 = vmatpush.msra.mxu0 0.0
  %168 = vmatpush.msra.mxu0 0.0
  %169 = vmatpush.msra.mxu0 %v156
  %170 = vmatpush.msra.mxu0 %v155
  %171 = vmatpush.msra.mxu0 %v154
  %172 = vmatpush.msra.mxu0 %v153
  %173 = vmatmul.f32.gmra.mxu0 %v96
  %v174 = vpop.f32.mrf.mxu0
  %v175 = vadd.f32 0.0, %v174
  %176 = vmatmul.f32.gmra.mxu0 %v99
  %v177 = vpop.f32.mrf.mxu0
  %v178 = vadd.f32 0.0, %v177
  %179 = vdwg.mxu0
  %s180 = scalar_lea.vmem %s5, 96
  %v181 = vld [vmem:[%s180] sm:$0xff]
  %v182 = vld [vmem:[%s180 + $0x8] sm:$0xff]
  %v183 = vld [vmem:[%s180 + $0x10] sm:$0xff]
  %v184 = vld [vmem:[%s180 + $0x18] sm:$0xff]
  %v186 = vsel %vm86, %v39, 0
  %188 = vmatpush.msra.mxu0 0.0
  %189 = vmatpush.msra.mxu0 0.0
  %190 = vmatpush.msra.mxu0 0.0
  %191 = vmatpush.msra.mxu0 0.0
  %192 = vmatpush.msra.mxu0 0.0
  %193 = vmatpush.msra.mxu0 0.0
  %194 = vmatpush.msra.mxu0 0.0
  %195 = vmatpush.msra.mxu0 0.0
  %196 = vmatpush.msra.mxu0 0.0
  %197 = vmatpush.msra.mxu0 0.0
  %198 = vmatpush.msra.mxu0 0.0
  %199 = vmatpush.msra.mxu0 0.0
  %200 = vmatpush.msra.mxu0 %v184
  %201 = vmatpush.msra.mxu0 %v183
  %202 = vmatpush.msra.mxu0 %v182
  %203 = vmatpush.msra.mxu0 %v181
  %204 = vmatmul.f32.gmra.mxu0 %v186
  %v205 = vpop.f32.mrf.mxu0
  %v206 = vadd.f32 0.0, %v205
  %207 = vdwg.mxu0
  %v208 = vperm.slane %v89, 5
  %v209 = vadd.f32 %v175, %v208
  %v210 = vadd.f32 %v178, %v208
  %v211 = vperm.slane %v89, 6
  %v212 = vadd.f32 %v175, %v211
  %v213 = vadd.f32 %v178, %v211
  %vm214 = vcmask 130048
  %v216 = vsel %vm214, %v42, 0
  %v219 = vsel %vm214, %v43, 0
  %v222 = vsel %vm214, %v44, 0
  %v225 = vsel %vm214, %v45, 0
  %v228 = vsel %vm214, %v46, 0
  %v231 = vsel %vm214, %v47, 0
  %v234 = vsel %vm214, %v48, 0
  %v237 = vsel %vm214, %v49, 0
  %v240 = vsel %vm214, %v50, 0
  %v243 = vsel %vm214, %v51, 0
  %v246 = vsel %vm214, %v52, 0
  %v249 = vsel %vm214, %v53, 0
  %v252 = vsel %vm214, %v54, 0
  %v255 = vsel %vm214, %v55, 0
  %v258 = vsel %vm214, %v56, 0
  %v261 = vsel %vm214, %v57, 0
  %263 = vmatpush.msra.mxu0 0.0
  %264 = vmatpush.msra.mxu0 0.0
  %265 = vmatpush.msra.mxu0 0.0
  %266 = vmatpush.msra.mxu0 0.0
  %267 = vmatpush.msra.mxu0 0.0
  %268 = vmatpush.msra.mxu0 0.0
  %269 = vmatpush.msra.mxu0 0.0
  %270 = vmatpush.msra.mxu0 0.0
  %271 = vmatpush.msra.mxu0 0.0
  %272 = vmatpush.msra.mxu0 0.0
  %273 = vmatpush.msra.mxu0 0.0
  %274 = vmatpush.msra.mxu0 0.0
  %275 = vmatpush.msra.mxu0 0.0
  %276 = vmatpush.msra.mxu0 0.0
  %277 = vmatpush.msra.mxu0 %v122
  %278 = vmatpush.msra.mxu0 %v119
  %279 = vmatmul.f32.gmra.mxu0 %v216
  %v280 = vpop.f32.mrf.mxu0
  %v281 = vadd.f32 0.0, %v280
  %282 = vmatmul.f32.gmra.mxu0 %v219
  %v283 = vpop.f32.mrf.mxu0
  %v284 = vadd.f32 0.0, %v283
  %285 = vmatmul.f32.gmra.mxu0 %v222
  %v286 = vpop.f32.mrf.mxu0
  %v287 = vadd.f32 0.0, %v286
  %288 = vmatmul.f32.gmra.mxu0 %v225
  %v289 = vpop.f32.mrf.mxu0
  %v290 = vadd.f32 0.0, %v289
  %291 = vmatmul.f32.gmra.mxu0 %v228
  %v292 = vpop.f32.mrf.mxu0
  %v293 = vadd.f32 0.0, %v292
  %294 = vmatmul.f32.gmra.mxu0 %v231
  %v295 = vpop.f32.mrf.mxu0
  %v296 = vadd.f32 0.0, %v295
  %297 = vmatmul.f32.gmra.mxu0 %v234
  %v298 = vpop.f32.mrf.mxu0
  %v299 = vadd.f32 0.0, %v298
  %300 = vmatmul.f32.gmra.mxu0 %v237
  %v301 = vpop.f32.mrf.mxu0
  %v302 = vadd.f32 0.0, %v301
  %303 = vmatmul.f32.gmra.mxu0 %v240
  %v304 = vpop.f32.mrf.mxu0
  %v305 = vadd.f32 0.0, %v304
  %306 = vmatmul.f32.gmra.mxu0 %v243
  %v307 = vpop.f32.mrf.mxu0
  %v308 = vadd.f32 0.0, %v307
  %309 = vmatmul.f32.gmra.mxu0 %v246
  %v310 = vpop.f32.mrf.mxu0
  %v311 = vadd.f32 0.0, %v310
  %312 = vmatmul.f32.gmra.mxu0 %v249
  %v313 = vpop.f32.mrf.mxu0
  %v314 = vadd.f32 0.0, %v313
  %315 = vmatmul.f32.gmra.mxu0 %v252
  %v316 = vpop.f32.mrf.mxu0
  %v317 = vadd.f32 0.0, %v316
  %318 = vmatmul.f32.gmra.mxu0 %v255
  %v319 = vpop.f32.mrf.mxu0
  %v320 = vadd.f32 0.0, %v319
  %321 = vmatmul.f32.gmra.mxu0 %v258
  %v322 = vpop.f32.mrf.mxu0
  %v323 = vadd.f32 0.0, %v322
  %324 = vmatmul.f32.gmra.mxu0 %v261
  %v325 = vpop.f32.mrf.mxu0
  %v326 = vadd.f32 0.0, %v325
  %327 = vdwg.mxu0
  %328 = vmatpush.msra.mxu0 0.0
  %329 = vmatpush.msra.mxu0 0.0
  %330 = vmatpush.msra.mxu0 0.0
  %331 = vmatpush.msra.mxu0 0.0
  %332 = vmatpush.msra.mxu0 0.0
  %333 = vmatpush.msra.mxu0 0.0
  %334 = vmatpush.msra.mxu0 0.0
  %335 = vmatpush.msra.mxu0 0.0
  %336 = vmatpush.msra.mxu0 0.0
  %337 = vmatpush.msra.mxu0 0.0
  %338 = vmatpush.msra.mxu0 0.0
  %339 = vmatpush.msra.mxu0 0.0
  %340 = vmatpush.msra.mxu0 0.0
  %341 = vmatpush.msra.mxu0 0.0
  %342 = vmatpush.msra.mxu0 %v150
  %343 = vmatpush.msra.mxu0 %v147
  %344 = vmatmul.f32.gmra.mxu0 %v216
  %v345 = vpop.f32.mrf.mxu0
  %v346 = vadd.f32 0.0, %v345
  %347 = vmatmul.f32.gmra.mxu0 %v219
  %v348 = vpop.f32.mrf.mxu0
  %v349 = vadd.f32 0.0, %v348
  %350 = vmatmul.f32.gmra.mxu0 %v222
  %v351 = vpop.f32.mrf.mxu0
  %v352 = vadd.f32 0.0, %v351
  %353 = vmatmul.f32.gmra.mxu0 %v225
  %v354 = vpop.f32.mrf.mxu0
  %v355 = vadd.f32 0.0, %v354
  %356 = vmatmul.f32.gmra.mxu0 %v228
  %v357 = vpop.f32.mrf.mxu0
  %v358 = vadd.f32 0.0, %v357
  %359 = vmatmul.f32.gmra.mxu0 %v231
  %v360 = vpop.f32.mrf.mxu0
  %v361 = vadd.f32 0.0, %v360
  %362 = vmatmul.f32.gmra.mxu0 %v234
  %v363 = vpop.f32.mrf.mxu0
  %v364 = vadd.f32 0.0, %v363
  %365 = vmatmul.f32.gmra.mxu0 %v237
  %v366 = vpop.f32.mrf.mxu0
  %v367 = vadd.f32 0.0, %v366
  %368 = vmatmul.f32.gmra.mxu0 %v240
  %v369 = vpop.f32.mrf.mxu0
  %v370 = vadd.f32 0.0, %v369
  %371 = vmatmul.f32.gmra.mxu0 %v243
  %v372 = vpop.f32.mrf.mxu0
  %v373 = vadd.f32 0.0, %v372
  %374 = vmatmul.f32.gmra.mxu0 %v246
  %v375 = vpop.f32.mrf.mxu0
  %v376 = vadd.f32 0.0, %v375
  %377 = vmatmul.f32.gmra.mxu0 %v249
  %v378 = vpop.f32.mrf.mxu0
  %v379 = vadd.f32 0.0, %v378
  %380 = vmatmul.f32.gmra.mxu0 %v252
  %v381 = vpop.f32.mrf.mxu0
  %v382 = vadd.f32 0.0, %v381
  %383 = vmatmul.f32.gmra.mxu0 %v255
  %v384 = vpop.f32.mrf.mxu0
  %v385 = vadd.f32 0.0, %v384
  %386 = vmatmul.f32.gmra.mxu0 %v258
  %v387 = vpop.f32.mrf.mxu0
  %v388 = vadd.f32 0.0, %v387
  %389 = vmatmul.f32.gmra.mxu0 %v261
  %v390 = vpop.f32.mrf.mxu0
  %v391 = vadd.f32 0.0, %v390
  %392 = vdwg.mxu0
  %vm393 = vcmask 64512
  %v395 = vsel %vm393, %v58, 0
  %v398 = vsel %vm393, %v59, 0
  %v401 = vsel %vm393, %v60, 0
  %v404 = vsel %vm393, %v61, 0
  %v407 = vsel %vm393, %v62, 0
  %v410 = vsel %vm393, %v63, 0
  %v413 = vsel %vm393, %v64, 0
  %v416 = vsel %vm393, %v65, 0
  %v419 = vsel %vm393, %v66, 0
  %v422 = vsel %vm393, %v67, 0
  %v425 = vsel %vm393, %v68, 0
  %v428 = vsel %vm393, %v69, 0
  %v431 = vsel %vm393, %v70, 0
  %v434 = vsel %vm393, %v71, 0
  %v437 = vsel %vm393, %v72, 0
  %v440 = vsel %vm393, %v73, 0
  %442 = vmatpush.msra.mxu0 0.0
  %443 = vmatpush.msra.mxu0 0.0
  %444 = vmatpush.msra.mxu0 0.0
  %445 = vmatpush.msra.mxu0 0.0
  %446 = vmatpush.msra.mxu0 0.0
  %447 = vmatpush.msra.mxu0 0.0
  %448 = vmatpush.msra.mxu0 0.0
  %449 = vmatpush.msra.mxu0 0.0
  %450 = vmatpush.msra.mxu0 0.0
  %451 = vmatpush.msra.mxu0 0.0
  %452 = vmatpush.msra.mxu0 0.0
  %453 = vmatpush.msra.mxu0 0.0
  %454 = vmatpush.msra.mxu0 0.0
  %455 = vmatpush.msra.mxu0 0.0
  %456 = vmatpush.msra.mxu0 0.0
  %457 = vmatpush.msra.mxu0 %v206
  %458 = vmatmul.f32.gmra.mxu0 %v395
  %v459 = vpop.f32.mrf.mxu0
  %v460 = vadd.f32 0.0, %v459
  %461 = vmatmul.f32.gmra.mxu0 %v398
  %v462 = vpop.f32.mrf.mxu0
  %v463 = vadd.f32 0.0, %v462
  %464 = vmatmul.f32.gmra.mxu0 %v401
  %v465 = vpop.f32.mrf.mxu0
  %v466 = vadd.f32 0.0, %v465
  %467 = vmatmul.f32.gmra.mxu0 %v404
  %v468 = vpop.f32.mrf.mxu0
  %v469 = vadd.f32 0.0, %v468
  %470 = vmatmul.f32.gmra.mxu0 %v407
  %v471 = vpop.f32.mrf.mxu0
  %v472 = vadd.f32 0.0, %v471
  %473 = vmatmul.f32.gmra.mxu0 %v410
  %v474 = vpop.f32.mrf.mxu0
  %v475 = vadd.f32 0.0, %v474
  %476 = vmatmul.f32.gmra.mxu0 %v413
  %v477 = vpop.f32.mrf.mxu0
  %v478 = vadd.f32 0.0, %v477
  %479 = vmatmul.f32.gmra.mxu0 %v416
  %v480 = vpop.f32.mrf.mxu0
  %v481 = vadd.f32 0.0, %v480
  %482 = vmatmul.f32.gmra.mxu0 %v419
  %v483 = vpop.f32.mrf.mxu0
  %v484 = vadd.f32 0.0, %v483
  %485 = vmatmul.f32.gmra.mxu0 %v422
  %v486 = vpop.f32.mrf.mxu0
  %v487 = vadd.f32 0.0, %v486
  %488 = vmatmul.f32.gmra.mxu0 %v425
  %v489 = vpop.f32.mrf.mxu0
  %v490 = vadd.f32 0.0, %v489
  %491 = vmatmul.f32.gmra.mxu0 %v428
  %v492 = vpop.f32.mrf.mxu0
  %v493 = vadd.f32 0.0, %v492
  %494 = vmatmul.f32.gmra.mxu0 %v431
  %v495 = vpop.f32.mrf.mxu0
  %v496 = vadd.f32 0.0, %v495
  %497 = vmatmul.f32.gmra.mxu0 %v434
  %v498 = vpop.f32.mrf.mxu0
  %v499 = vadd.f32 0.0, %v498
  %500 = vmatmul.f32.gmra.mxu0 %v437
  %v501 = vpop.f32.mrf.mxu0
  %v502 = vadd.f32 0.0, %v501
  %503 = vmatmul.f32.gmra.mxu0 %v440
  %v504 = vpop.f32.mrf.mxu0
  %v505 = vadd.f32 0.0, %v504
  %506 = vdwg.mxu0
  %v507 = vmul.f32 %v209, %v80
  %v508 = vmul.f32 %v210, %v80
  %v509 = vmul.f32 %v212, %v80
  %v510 = vmul.f32 %v213, %v80
  %v512 = vsel %vm86, %v509, 0
  %v515 = vsel %vm86, %v510, 0
  %v518 = vsel %vm86, %v460, 0
  %v521 = vsel %vm86, %v463, 0
  %v524 = vsel %vm86, %v466, 0
  %v527 = vsel %vm86, %v469, 0
  %v530 = vsel %vm86, %v472, 0
  %v533 = vsel %vm86, %v475, 0
  %v536 = vsel %vm86, %v478, 0
  %v539 = vsel %vm86, %v481, 0
  %v542 = vsel %vm86, %v484, 0
  %v545 = vsel %vm86, %v487, 0
  %v548 = vsel %vm86, %v490, 0
  %v551 = vsel %vm86, %v493, 0
  %v554 = vsel %vm86, %v496, 0
  %v557 = vsel %vm86, %v499, 0
  %v560 = vsel %vm86, %v502, 0
  %v563 = vsel %vm86, %v505, 0
  %565 = vmatpush.xpose.msra.mxu0 %v563
  %566 = vmatpush.xpose.msra.mxu0 %v560
  %567 = vmatpush.xpose.msra.mxu0 %v557
  %568 = vmatpush.xpose.msra.mxu0 %v554
  %569 = vmatpush.xpose.msra.mxu0 %v551
  %570 = vmatpush.xpose.msra.mxu0 %v548
  %571 = vmatpush.xpose.msra.mxu0 %v545
  %572 = vmatpush.xpose.msra.mxu0 %v542
  %573 = vmatpush.xpose.msra.mxu0 %v539
  %574 = vmatpush.xpose.msra.mxu0 %v536
  %575 = vmatpush.xpose.msra.mxu0 %v533
  %576 = vmatpush.xpose.msra.mxu0 %v530
  %577 = vmatpush.xpose.msra.mxu0 %v527
  %578 = vmatpush.xpose.msra.mxu0 %v524
  %579 = vmatpush.xpose.msra.mxu0 %v521
  %580 = vmatpush.xpose.msra.mxu0 %v518
  %581 = vmatmul.f32.gmra.mxu0 %v512
  %v582 = vpop.f32.mrf.mxu0
  %v583 = vadd.f32 0.0, %v582
  %584 = vmatmul.f32.gmra.mxu0 %v515
  %v585 = vpop.f32.mrf.mxu0
  %v586 = vadd.f32 0.0, %v585
  %587 = vdwg.mxu0
  %v589 = vsel %vm86, %v507, 0
  %v592 = vsel %vm86, %v508, 0
  %v595 = vsel %vm86, %v281, 0
  %v598 = vsel %vm86, %v284, 0
  %v601 = vsel %vm86, %v287, 0
  %v604 = vsel %vm86, %v290, 0
  %v607 = vsel %vm86, %v293, 0
  %v610 = vsel %vm86, %v296, 0
  %v613 = vsel %vm86, %v299, 0
  %v616 = vsel %vm86, %v302, 0
  %v619 = vsel %vm86, %v305, 0
  %v622 = vsel %vm86, %v308, 0
  %v625 = vsel %vm86, %v311, 0
  %v628 = vsel %vm86, %v314, 0
  %v631 = vsel %vm86, %v317, 0
  %v634 = vsel %vm86, %v320, 0
  %v637 = vsel %vm86, %v323, 0
  %v640 = vsel %vm86, %v326, 0
  %642 = vmatpush.xpose.msra.mxu0 %v640
  %643 = vmatpush.xpose.msra.mxu0 %v637
  %644 = vmatpush.xpose.msra.mxu0 %v634
  %645 = vmatpush.xpose.msra.mxu0 %v631
  %646 = vmatpush.xpose.msra.mxu0 %v628
  %647 = vmatpush.xpose.msra.mxu0 %v625
  %648 = vmatpush.xpose.msra.mxu0 %v622
  %649 = vmatpush.xpose.msra.mxu0 %v619
  %650 = vmatpush.xpose.msra.mxu0 %v616
  %651 = vmatpush.xpose.msra.mxu0 %v613
  %652 = vmatpush.xpose.msra.mxu0 %v610
  %653 = vmatpush.xpose.msra.mxu0 %v607
  %654 = vmatpush.xpose.msra.mxu0 %v604
  %655 = vmatpush.xpose.msra.mxu0 %v601
  %656 = vmatpush.xpose.msra.mxu0 %v598
  %657 = vmatpush.xpose.msra.mxu0 %v595
  %658 = vmatmul.f32.gmra.mxu0 %v589
  %v659 = vpop.f32.mrf.mxu0
  %v660 = vadd.f32 %v583, %v659
  %661 = vmatmul.f32.gmra.mxu0 %v592
  %v662 = vpop.f32.mrf.mxu0
  %v663 = vadd.f32 %v586, %v662
  %664 = vdwg.mxu0
  %v665 = vadd.f32 %v660, %v40
  %v666 = vadd.f32 %v663, %v41
  %667 = vmax.xlane.f32.xlu0 %v665
  %v668 = vpop.xlane.xlu0 %667
  %669 = vmax.xlane.f32.xlu0 %v666
  %v670 = vpop.xlane.xlu0 %669
  %v671 = vsub.f32 %v665, %v668
  %v672 = vsub.f32 %v666, %v670
  %v673 = vmul.f32 %v671, 1.442695
  %v674 = vpow.pop %v673
  %v675 = vmul.f32 %v672, 1.442695
  %v676 = vpow.pop %v675
  %677 = vadd.xlane.f32.xlu0 %v674
  %v678 = vpop.xlane.xlu0 %677
  %679 = vadd.xlane.f32.xlu0 %v676
  %v680 = vpop.xlane.xlu0 %679
  %v681 = vrcp.pop %v678
  %v682 = vrcp.pop %v680
  %v683 = vmul.f32 %v674, %v681
  %v684 = vmul.f32 %v676, %v682
  %685 = vmatpush.msra.mxu0 %v391
  %686 = vmatpush.msra.mxu0 %v388
  %687 = vmatpush.msra.mxu0 %v385
  %688 = vmatpush.msra.mxu0 %v382
  %689 = vmatpush.msra.mxu0 %v379
  %690 = vmatpush.msra.mxu0 %v376
  %691 = vmatpush.msra.mxu0 %v373
  %692 = vmatpush.msra.mxu0 %v370
  %693 = vmatpush.msra.mxu0 %v367
  %694 = vmatpush.msra.mxu0 %v364
  %695 = vmatpush.msra.mxu0 %v361
  %696 = vmatpush.msra.mxu0 %v358
  %697 = vmatpush.msra.mxu0 %v355
  %698 = vmatpush.msra.mxu0 %v352
  %699 = vmatpush.msra.mxu0 %v349
  %700 = vmatpush.msra.mxu0 %v346
  %701 = vmatmul.f32.gmra.mxu0 %v683
  %v702 = vpop.f32.mrf.mxu0
  %v703 = vadd.f32 0.0, %v702
  %704 = vmatmul.f32.gmra.mxu0 %v684
  %v705 = vpop.f32.mrf.mxu0
  %v706 = vadd.f32 0.0, %v705
  %707 = vdwg.mxu0
  %v708 = vmul.f32 %v703, %v80
  %v709 = vmul.f32 %v706, %v80
  %v710 = vadd.f32 %v708, 0.0
  %v711 = vadd.f32 %v709, 0.0
  %v712 = vmul.f32 %v209, %v85
  %v713 = vmul.f32 %v210, %v85
  %v714 = vmul.f32 %v212, %v85
  %v715 = vmul.f32 %v213, %v85
  %v717 = vsel %vm86, %v714, 0
  %v720 = vsel %vm86, %v715, 0
  %722 = vmatpush.xpose.msra.mxu0 %v563
  %723 = vmatpush.xpose.msra.mxu0 %v560
  %724 = vmatpush.xpose.msra.mxu0 %v557
  %725 = vmatpush.xpose.msra.mxu0 %v554
  %726 = vmatpush.xpose.msra.mxu0 %v551
  %727 = vmatpush.xpose.msra.mxu0 %v548
  %728 = vmatpush.xpose.msra.mxu0 %v545
  %729 = vmatpush.xpose.msra.mxu0 %v542
  %730 = vmatpush.xpose.msra.mxu0 %v539
  %731 = vmatpush.xpose.msra.mxu0 %v536
  %732 = vmatpush.xpose.msra.mxu0 %v533
  %733 = vmatpush.xpose.msra.mxu0 %v530
  %734 = vmatpush.xpose.msra.mxu0 %v527
  %735 = vmatpush.xpose.msra.mxu0 %v524
  %736 = vmatpush.xpose.msra.mxu0 %v521
  %737 = vmatpush.xpose.msra.mxu0 %v518
  %738 = vmatmul.f32.gmra.mxu0 %v717
  %v739 = vpop.f32.mrf.mxu0
  %v740 = vadd.f32 0.0, %v739
  %741 = vmatmul.f32.gmra.mxu0 %v720
  %v742 = vpop.f32.mrf.mxu0
  %v743 = vadd.f32 0.0, %v742
  %744 = vdwg.mxu0
  %v746 = vsel %vm86, %v712, 0
  %v749 = vsel %vm86, %v713, 0
  %751 = vmatpush.xpose.msra.mxu0 %v640
  %752 = vmatpush.xpose.msra.mxu0 %v637
  %753 = vmatpush.xpose.msra.mxu0 %v634
  %754 = vmatpush.xpose.msra.mxu0 %v631
  %755 = vmatpush.xpose.msra.mxu0 %v628
  %756 = vmatpush.xpose.msra.mxu0 %v625
  %757 = vmatpush.xpose.msra.mxu0 %v622
  %758 = vmatpush.xpose.msra.mxu0 %v619
  %759 = vmatpush.xpose.msra.mxu0 %v616
  %760 = vmatpush.xpose.msra.mxu0 %v613
  %761 = vmatpush.xpose.msra.mxu0 %v610
  %762 = vmatpush.xpose.msra.mxu0 %v607
  %763 = vmatpush.xpose.msra.mxu0 %v604
  %764 = vmatpush.xpose.msra.mxu0 %v601
  %765 = vmatpush.xpose.msra.mxu0 %v598
  %766 = vmatpush.xpose.msra.mxu0 %v595
  %767 = vmatmul.f32.gmra.mxu0 %v746
  %v768 = vpop.f32.mrf.mxu0
  %v769 = vadd.f32 %v740, %v768
  %770 = vmatmul.f32.gmra.mxu0 %v749
  %v771 = vpop.f32.mrf.mxu0
  %v772 = vadd.f32 %v743, %v771
  %773 = vdwg.mxu0
  %v774 = vadd.f32 %v769, %v40
  %v775 = vadd.f32 %v772, %v41
  %776 = vmax.xlane.f32.xlu0 %v774
  %v777 = vpop.xlane.xlu0 %776
  %778 = vmax.xlane.f32.xlu0 %v775
  %v779 = vpop.xlane.xlu0 %778
  %v780 = vsub.f32 %v774, %v777
  %v781 = vsub.f32 %v775, %v779
  %v782 = vmul.f32 %v780, 1.442695
  %v783 = vpow.pop %v782
  %v784 = vmul.f32 %v781, 1.442695
  %v785 = vpow.pop %v784
  %786 = vadd.xlane.f32.xlu0 %v783
  %v787 = vpop.xlane.xlu0 %786
  %788 = vadd.xlane.f32.xlu0 %v785
  %v789 = vpop.xlane.xlu0 %788
  %v790 = vrcp.pop %v787
  %v791 = vrcp.pop %v789
  %v792 = vmul.f32 %v783, %v790
  %v793 = vmul.f32 %v785, %v791
  %794 = vmatpush.msra.mxu0 %v391
  %795 = vmatpush.msra.mxu0 %v388
  %796 = vmatpush.msra.mxu0 %v385
  %797 = vmatpush.msra.mxu0 %v382
  %798 = vmatpush.msra.mxu0 %v379
  %799 = vmatpush.msra.mxu0 %v376
  %800 = vmatpush.msra.mxu0 %v373
  %801 = vmatpush.msra.mxu0 %v370
  %802 = vmatpush.msra.mxu0 %v367
  %803 = vmatpush.msra.mxu0 %v364
  %804 = vmatpush.msra.mxu0 %v361
  %805 = vmatpush.msra.mxu0 %v358
  %806 = vmatpush.msra.mxu0 %v355
  %807 = vmatpush.msra.mxu0 %v352
  %808 = vmatpush.msra.mxu0 %v349
  %809 = vmatpush.msra.mxu0 %v346
  %810 = vmatmul.f32.gmra.mxu0 %v792
  %v811 = vpop.f32.mrf.mxu0
  %v812 = vadd.f32 0.0, %v811
  %813 = vmatmul.f32.gmra.mxu0 %v793
  %v814 = vpop.f32.mrf.mxu0
  %v815 = vadd.f32 0.0, %v814
  %816 = vdwg.mxu0
  %v817 = vmul.f32 %v812, %v85
  %v818 = vmul.f32 %v815, %v85
  %v819 = vadd.f32 %v710, %v817
  %v820 = vadd.f32 %v711, %v818
  %s821 = scalar_lea.vmem %s5, 128
  %v822 = vld [vmem:[%s821] sm:$0xff]
  %v823 = vld [vmem:[%s821 + $0x8] sm:$0xff]
  %v824 = vld [vmem:[%s821 + $0x10] sm:$0xff]
  %v825 = vld [vmem:[%s821 + $0x18] sm:$0xff]
  %v827 = vsel %vm86, %v819, 0
  %v830 = vsel %vm86, %v820, 0
  %832 = vmatpush.msra.mxu0 0.0
  %833 = vmatpush.msra.mxu0 0.0
  %834 = vmatpush.msra.mxu0 0.0
  %835 = vmatpush.msra.mxu0 0.0
  %836 = vmatpush.msra.mxu0 0.0
  %837 = vmatpush.msra.mxu0 0.0
  %838 = vmatpush.msra.mxu0 0.0
  %839 = vmatpush.msra.mxu0 0.0
  %840 = vmatpush.msra.mxu0 0.0
  %841 = vmatpush.msra.mxu0 0.0
  %842 = vmatpush.msra.mxu0 0.0
  %843 = vmatpush.msra.mxu0 0.0
  %844 = vmatpush.msra.mxu0 %v825
  %845 = vmatpush.msra.mxu0 %v824
  %846 = vmatpush.msra.mxu0 %v823
  %847 = vmatpush.msra.mxu0 %v822
  %848 = vmatmul.f32.gmra.mxu0 %v827
  %v849 = vpop.f32.mrf.mxu0
  %v850 = vadd.f32 0.0, %v849
  %851 = vmatmul.f32.gmra.mxu0 %v830
  %v852 = vpop.f32.mrf.mxu0
  %v853 = vadd.f32 0.0, %v852
  %854 = vdwg.mxu0
  %v855 = vadd.f32 %v37, %v850
  %v856 = vadd.f32 %v38, %v853
  %v857 = vsel %vm86, %v855, 0.0
  %858 = vadd.xlane.f32.xlu0 %v857
  %v859 = vpop.xlane.xlu0 %858
  %v860 = vsel %vm86, %v856, 0.0
  %861 = vadd.xlane.f32.xlu0 %v860
  %v862 = vpop.xlane.xlu0 %861
  %v863 = vrcp.pop 32.0
  %v864 = vmul.f32 32.0, %v863
  %v865 = vsub.f32 1.0, %v864
  %v866 = vmul.f32 %v863, %v865
  %v867 = vadd.f32 %v863, %v866
  %vm868 = vweird.f32 %v863
  %v869 = vsel %vm868, %v863, %v867
  %v870 = vmul.f32 %v859, %v869
  %v871 = vmul.f32 %v862, %v869
  %v872 = vsub.f32 %v855, %v870
  %v873 = vsub.f32 %v856, %v871
  %v874 = vmul.f32 %v872, %v872
  %v875 = vmul.f32 %v873, %v873
  %v876 = vsel %vm86, %v874, 0.0
  %877 = vadd.xlane.f32.xlu0 %v876
  %v878 = vpop.xlane.xlu0 %877
  %v879 = vsel %vm86, %v875, 0.0
  %880 = vadd.xlane.f32.xlu0 %v879
  %v881 = vpop.xlane.xlu0 %880
  %v882 = vmul.f32 %v878, %v869
  %v883 = vmul.f32 %v881, %v869
  %v884 = vadd.f32 %v882, 1e-05
  %v885 = vadd.f32 %v883, 1e-05
  %v886 = vrsqrt.pop %v884
  %v887 = vmul.f32 %v886, %v884
  %v888 = vmul.f32 %v887, %v886
  %v889 = vmul.f32 0.5, %v888
  %v890 = vsub.f32 1.5, %v889
  %v891 = vmul.f32 %v886, %v890
  %vm892 = vweird.f32 %v884
  %vm893 = vweird.f32 %v886
  %vm894 = vmor %vm892, %vm893
  %v895 = vsel %vm894, %v886, %v891
  %v896 = vrsqrt.pop %v885
  %v897 = vmul.f32 %v896, %v885
  %v898 = vmul.f32 %v897, %v896
  %v899 = vmul.f32 0.5, %v898
  %v900 = vsub.f32 1.5, %v899
  %v901 = vmul.f32 %v896, %v900
  %vm902 = vweird.f32 %v885
  %vm903 = vweird.f32 %v896
  %vm904 = vmor %vm902, %vm903
  %v905 = vsel %vm904, %v896, %v901
  %v906 = vmul.f32 %v872, %v895
  %v907 = vmul.f32 %v873, %v905
  %v908 = vperm.slane %v89, 0
  %v909 = vmul.f32 %v906, %v908
  %v910 = vmul.f32 %v907, %v908
  %v911 = vperm.slane %v89, 1
  %v912 = vadd.f32 %v909, %v911
  %v913 = vadd.f32 %v910, %v911
  %v914 = vld [vmem:[%s6] sm:$0xff]
  %v915 = vld [vmem:[%s6 + $0x8] sm:$0xff]
  %v916 = vld [vmem:[%s6 + $0x10] sm:$0xff]
  %v917 = vld [vmem:[%s6 + $0x18] sm:$0xff]
  %v919 = vperm.slane %v90, 0
  %v922 = vsel %vm86, %v912, 0
  %v925 = vsel %vm86, %v913, 0
  %927 = vmatpush.msra.mxu0 0.0
  %928 = vmatpush.msra.mxu0 0.0
  %929 = vmatpush.msra.mxu0 0.0
  %930 = vmatpush.msra.mxu0 0.0
  %931 = vmatpush.msra.mxu0 0.0
  %932 = vmatpush.msra.mxu0 0.0
  %933 = vmatpush.msra.mxu0 0.0
  %934 = vmatpush.msra.mxu0 0.0
  %935 = vmatpush.msra.mxu0 0.0
  %936 = vmatpush.msra.mxu0 0.0
  %937 = vmatpush.msra.mxu0 0.0
  %938 = vmatpush.msra.mxu0 0.0
  %939 = vmatpush.msra.mxu0 %v917
  %940 = vmatpush.msra.mxu0 %v916
  %941 = vmatpush.msra.mxu0 %v915
  %942 = vmatpush.msra.mxu0 %v914
  %943 = vmatmul.f32.gmra.mxu0 %v922
  %v944 = vpop.f32.mrf.mxu0
  %v945 = vadd.f32 %v919, %v944
  %946 = vmatmul.f32.gmra.mxu0 %v925
  %v947 = vpop.f32.mrf.mxu0
  %v948 = vadd.f32 %v919, %v947
  %949 = vdwg.mxu0
  %v950 = vmax.f32 %v945, 0.0
  %v951 = vmax.f32 %v948, 0.0
  %s952 = scalar_lea.vmem %s6, 32
  %v953 = vld [vmem:[%s952] sm:$0xff]
  %v954 = vld [vmem:[%s952 + $0x8] sm:$0xff]
  %v955 = vld [vmem:[%s952 + $0x10] sm:$0xff]
  %v956 = vld [vmem:[%s952 + $0x18] sm:$0xff]
  %v957 = vperm.slane %v89, 4
  %vm958 = vcmask 523264
  %v960 = vsel %vm958, %v950, 0
  %v963 = vsel %vm958, %v951, 0
  %v966 = vsel %vm958, %v953, 0
  %v969 = vsel %vm958, %v954, 0
  %v972 = vsel %vm958, %v955, 0
  %v975 = vsel %vm958, %v956, 0
  %977 = vmatpush.xpose.msra.mxu0 0.0
  %978 = vmatpush.xpose.msra.mxu0 0.0
  %979 = vmatpush.xpose.msra.mxu0 0.0
  %980 = vmatpush.xpose.msra.mxu0 0.0
  %981 = vmatpush.xpose.msra.mxu0 0.0
  %982 = vmatpush.xpose.msra.mxu0 0.0
  %983 = vmatpush.xpose.msra.mxu0 0.0
  %984 = vmatpush.xpose.msra.mxu0 0.0
  %985 = vmatpush.xpose.msra.mxu0 0.0
  %986 = vmatpush.xpose.msra.mxu0 0.0
  %987 = vmatpush.xpose.msra.mxu0 0.0
  %988 = vmatpush.xpose.msra.mxu0 0.0
  %989 = vmatpush.xpose.msra.mxu0 %v975
  %990 = vmatpush.xpose.msra.mxu0 %v972
  %991 = vmatpush.xpose.msra.mxu0 %v969
  %992 = vmatpush.xpose.msra.mxu0 %v966
  %993 = vmatmul.f32.gmra.mxu0 %v960
  %v994 = vpop.f32.mrf.mxu0
  %v995 = vadd.f32 %v957, %v994
  %996 = vmatmul.f32.gmra.mxu0 %v963
  %v997 = vpop.f32.mrf.mxu0
  %v998 = vadd.f32 %v957, %v997
  %999 = vdwg.mxu0
  %v1000 = vadd.f32 %v912, %v995
  %v1001 = vadd.f32 %v913, %v998
  %v1002 = vsel %vm86, %v1000, 0.0
  %1003 = vadd.xlane.f32.xlu0 %v1002
  %v1004 = vpop.xlane.xlu0 %1003
  %v1005 = vsel %vm86, %v1001, 0.0
  %1006 = vadd.xlane.f32.xlu0 %v1005
  %v1007 = vpop.xlane.xlu0 %1006
  %v1008 = vmul.f32 %v1004, %v869
  %v1009 = vmul.f32 %v1007, %v869
  %v1010 = vsub.f32 %v1000, %v1008
  %v1011 = vsub.f32 %v1001, %v1009
  %v1012 = vmul.f32 %v1010, %v1010
  %v1013 = vmul.f32 %v1011, %v1011
  %v1014 = vsel %vm86, %v1012, 0.0
  %1015 = vadd.xlane.f32.xlu0 %v1014
  %v1016 = vpop.xlane.xlu0 %1015
  %v1017 = vsel %vm86, %v1013, 0.0
  %1018 = vadd.xlane.f32.xlu0 %v1017
  %v1019 = vpop.xlane.xlu0 %1018
  %v1020 = vmul.f32 %v1016, %v869
  %v1021 = vmul.f32 %v1019, %v869
  %v1022 = vadd.f32 %v1020, 1e-05
  %v1023 = vadd.f32 %v1021, 1e-05
  %v1024 = vrsqrt.pop %v1022
  %v1025 = vmul.f32 %v1024, %v1022
  %v1026 = vmul.f32 %v1025, %v1024
  %v1027 = vmul.f32 0.5, %v1026
  %v1028 = vsub.f32 1.5, %v1027
  %v1029 = vmul.f32 %v1024, %v1028
  %vm1030 = vweird.f32 %v1022
  %vm1031 = vweird.f32 %v1024
  %vm1032 = vmor %vm1030, %vm1031
  %v1033 = vsel %vm1032, %v1024, %v1029
  %v1034 = vrsqrt.pop %v1023
  %v1035 = vmul.f32 %v1034, %v1023
  %v1036 = vmul.f32 %v1035, %v1034
  %v1037 = vmul.f32 0.5, %v1036
  %v1038 = vsub.f32 1.5, %v1037
  %v1039 = vmul.f32 %v1034, %v1038
  %vm1040 = vweird.f32 %v1023
  %vm1041 = vweird.f32 %v1034
  %vm1042 = vmor %vm1040, %vm1041
  %v1043 = vsel %vm1042, %v1034, %v1039
  %v1044 = vmul.f32 %v1010, %v1033
  %v1045 = vmul.f32 %v1011, %v1043
  %v1046 = vperm.slane %v89, 2
  %v1047 = vmul.f32 %v1044, %v1046
  %v1048 = vmul.f32 %v1045, %v1046
  %v1049 = vperm.slane %v89, 3
  %v1050 = vadd.f32 %v1047, %v1049
  %v1051 = vadd.f32 %v1048, %v1049
  %s1052 = scalar_lea.vmem %s11, 16
  %1053 = vst.msk [vmem:[%s1052] sm:$0xff] %vm86, %v1050
  %1054 = vst.msk [vmem:[%s1052 + $0x8] sm:$0xff] %vm86, %v1051
  %s1055 = scalar_lea.vmem %s7, 8
  %v1056 = vld [vmem:[%s1055] sm:$0xff]
  %s1057 = scalar_lea.vmem %s8, 1
  %v1058 = vld [vmem:[%s1057] sm:$0x1]
  %s1059 = scalar_lea.vmem %s5, 160
  %v1060 = vld [vmem:[%s1059] sm:$0xff]
  %v1061 = vld [vmem:[%s1059 + $0x8] sm:$0xff]
  %v1062 = vld [vmem:[%s1059 + $0x10] sm:$0xff]
  %v1063 = vld [vmem:[%s1059 + $0x18] sm:$0xff]
  %v1065 = vsel %vm86, %v1050, 0
  %v1068 = vsel %vm86, %v1051, 0
  %1070 = vmatpush.msra.mxu0 0.0
  %1071 = vmatpush.msra.mxu0 0.0
  %1072 = vmatpush.msra.mxu0 0.0
  %1073 = vmatpush.msra.mxu0 0.0
  %1074 = vmatpush.msra.mxu0 0.0
  %1075 = vmatpush.msra.mxu0 0.0
  %1076 = vmatpush.msra.mxu0 0.0
  %1077 = vmatpush.msra.mxu0 0.0
  %1078 = vmatpush.msra.mxu0 0.0
  %1079 = vmatpush.msra.mxu0 0.0
  %1080 = vmatpush.msra.mxu0 0.0
  %1081 = vmatpush.msra.mxu0 0.0
  %1082 = vmatpush.msra.mxu0 %v1063
  %1083 = vmatpush.msra.mxu0 %v1062
  %1084 = vmatpush.msra.mxu0 %v1061
  %1085 = vmatpush.msra.mxu0 %v1060
  %1086 = vmatmul.f32.gmra.mxu0 %v1065
  %v1087 = vpop.f32.mrf.mxu0
  %v1088 = vadd.f32 0.0, %v1087
  %1089 = vmatmul.f32.gmra.mxu0 %v1068
  %v1090 = vpop.f32.mrf.mxu0
  %v1091 = vadd.f32 0.0, %v1090
  %1092 = vdwg.mxu0
  %s1093 = scalar_lea.vmem %s5, 192
  %v1094 = vld [vmem:[%s1093] sm:$0xff]
  %v1095 = vld [vmem:[%s1093 + $0x8] sm:$0xff]
  %v1096 = vld [vmem:[%s1093 + $0x10] sm:$0xff]
  %v1097 = vld [vmem:[%s1093 + $0x18] sm:$0xff]
  %1098 = vmatpush.msra.mxu0 0.0
  %1099 = vmatpush.msra.mxu0 0.0
  %1100 = vmatpush.msra.mxu0 0.0
  %1101 = vmatpush.msra.mxu0 0.0
  %1102 = vmatpush.msra.mxu0 0.0
  %1103 = vmatpush.msra.mxu0 0.0
  %1104 = vmatpush.msra.mxu0 0.0
  %1105 = vmatpush.msra.mxu0 0.0
  %1106 = vmatpush.msra.mxu0 0.0
  %1107 = vmatpush.msra.mxu0 0.0
  %1108 = vmatpush.msra.mxu0 0.0
  %1109 = vmatpush.msra.mxu0 0.0
  %1110 = vmatpush.msra.mxu0 %v1097
  %1111 = vmatpush.msra.mxu0 %v1096
  %1112 = vmatpush.msra.mxu0 %v1095
  %1113 = vmatpush.msra.mxu0 %v1094
  %1114 = vmatmul.f32.gmra.mxu0 %v1065
  %v1115 = vpop.f32.mrf.mxu0
  %v1116 = vadd.f32 0.0, %v1115
  %1117 = vmatmul.f32.gmra.mxu0 %v1068
  %v1118 = vpop.f32.mrf.mxu0
  %v1119 = vadd.f32 0.0, %v1118
  %1120 = vdwg.mxu0
  %s1121 = scalar_lea.vmem %s5, 224
  %v1122 = vld [vmem:[%s1121] sm:$0xff]
  %v1123 = vld [vmem:[%s1121 + $0x8] sm:$0xff]
  %v1124 = vld [vmem:[%s1121 + $0x10] sm:$0xff]
  %v1125 = vld [vmem:[%s1121 + $0x18] sm:$0xff]
  %1126 = vmatpush.msra.mxu0 0.0
  %1127 = vmatpush.msra.mxu0 0.0
  %1128 = vmatpush.msra.mxu0 0.0
  %1129 = vmatpush.msra.mxu0 0.0
  %1130 = vmatpush.msra.mxu0 0.0
  %1131 = vmatpush.msra.mxu0 0.0
  %1132 = vmatpush.msra.mxu0 0.0
  %1133 = vmatpush.msra.mxu0 0.0
  %1134 = vmatpush.msra.mxu0 0.0
  %1135 = vmatpush.msra.mxu0 0.0
  %1136 = vmatpush.msra.mxu0 0.0
  %1137 = vmatpush.msra.mxu0 0.0
  %1138 = vmatpush.msra.mxu0 %v1125
  %1139 = vmatpush.msra.mxu0 %v1124
  %1140 = vmatpush.msra.mxu0 %v1123
  %1141 = vmatpush.msra.mxu0 %v1122
  %1142 = vmatmul.f32.gmra.mxu0 %v1065
  %v1143 = vpop.f32.mrf.mxu0
  %v1144 = vadd.f32 0.0, %v1143
  %1145 = vmatmul.f32.gmra.mxu0 %v1068
  %v1146 = vpop.f32.mrf.mxu0
  %v1147 = vadd.f32 0.0, %v1146
  %1148 = vdwg.mxu0
  %s1149 = scalar_lea.vmem %s5, 256
  %v1150 = vld [vmem:[%s1149] sm:$0xff]
  %v1151 = vld [vmem:[%s1149 + $0x8] sm:$0xff]
  %v1152 = vld [vmem:[%s1149 + $0x10] sm:$0xff]
  %v1153 = vld [vmem:[%s1149 + $0x18] sm:$0xff]
  %1154 = vmatpush.msra.mxu0 0.0
  %1155 = vmatpush.msra.mxu0 0.0
  %1156 = vmatpush.msra.mxu0 0.0
  %1157 = vmatpush.msra.mxu0 0.0
  %1158 = vmatpush.msra.mxu0 0.0
  %1159 = vmatpush.msra.mxu0 0.0
  %1160 = vmatpush.msra.mxu0 0.0
  %1161 = vmatpush.msra.mxu0 0.0
  %1162 = vmatpush.msra.mxu0 0.0
  %1163 = vmatpush.msra.mxu0 0.0
  %1164 = vmatpush.msra.mxu0 0.0
  %1165 = vmatpush.msra.mxu0 0.0
  %1166 = vmatpush.msra.mxu0 %v1153
  %1167 = vmatpush.msra.mxu0 %v1152
  %1168 = vmatpush.msra.mxu0 %v1151
  %1169 = vmatpush.msra.mxu0 %v1150
  %1170 = vmatmul.f32.gmra.mxu0 %v186
  %v1171 = vpop.f32.mrf.mxu0
  %v1172 = vadd.f32 0.0, %v1171
  %1173 = vdwg.mxu0
  %v1174 = vperm.slane %v1056, 5
  %v1175 = vadd.f32 %v1144, %v1174
  %v1176 = vadd.f32 %v1147, %v1174
  %v1177 = vperm.slane %v1056, 6
  %v1178 = vadd.f32 %v1144, %v1177
  %v1179 = vadd.f32 %v1147, %v1177
  %1180 = vmatpush.msra.mxu0 0.0
  %1181 = vmatpush.msra.mxu0 0.0
  %1182 = vmatpush.msra.mxu0 0.0
  %1183 = vmatpush.msra.mxu0 0.0
  %1184 = vmatpush.msra.mxu0 0.0
  %1185 = vmatpush.msra.mxu0 0.0
  %1186 = vmatpush.msra.mxu0 0.0
  %1187 = vmatpush.msra.mxu0 0.0
  %1188 = vmatpush.msra.mxu0 0.0
  %1189 = vmatpush.msra.mxu0 0.0
  %1190 = vmatpush.msra.mxu0 0.0
  %1191 = vmatpush.msra.mxu0 0.0
  %1192 = vmatpush.msra.mxu0 0.0
  %1193 = vmatpush.msra.mxu0 0.0
  %1194 = vmatpush.msra.mxu0 %v1091
  %1195 = vmatpush.msra.mxu0 %v1088
  %1196 = vmatmul.f32.gmra.mxu0 %v216
  %v1197 = vpop.f32.mrf.mxu0
  %v1198 = vadd.f32 0.0, %v1197
  %1199 = vmatmul.f32.gmra.mxu0 %v219
  %v1200 = vpop.f32.mrf.mxu0
  %v1201 = vadd.f32 0.0, %v1200
  %1202 = vmatmul.f32.gmra.mxu0 %v222
  %v1203 = vpop.f32.mrf.mxu0
  %v1204 = vadd.f32 0.0, %v1203
  %1205 = vmatmul.f32.gmra.mxu0 %v225
  %v1206 = vpop.f32.mrf.mxu0
  %v1207 = vadd.f32 0.0, %v1206
  %1208 = vmatmul.f32.gmra.mxu0 %v228
  %v1209 = vpop.f32.mrf.mxu0
  %v1210 = vadd.f32 0.0, %v1209
  %1211 = vmatmul.f32.gmra.mxu0 %v231
  %v1212 = vpop.f32.mrf.mxu0
  %v1213 = vadd.f32 0.0, %v1212
  %1214 = vmatmul.f32.gmra.mxu0 %v234
  %v1215 = vpop.f32.mrf.mxu0
  %v1216 = vadd.f32 0.0, %v1215
  %1217 = vmatmul.f32.gmra.mxu0 %v237
  %v1218 = vpop.f32.mrf.mxu0
  %v1219 = vadd.f32 0.0, %v1218
  %1220 = vmatmul.f32.gmra.mxu0 %v240
  %v1221 = vpop.f32.mrf.mxu0
  %v1222 = vadd.f32 0.0, %v1221
  %1223 = vmatmul.f32.gmra.mxu0 %v243
  %v1224 = vpop.f32.mrf.mxu0
  %v1225 = vadd.f32 0.0, %v1224
  %1226 = vmatmul.f32.gmra.mxu0 %v246
  %v1227 = vpop.f32.mrf.mxu0
  %v1228 = vadd.f32 0.0, %v1227
  %1229 = vmatmul.f32.gmra.mxu0 %v249
  %v1230 = vpop.f32.mrf.mxu0
  %v1231 = vadd.f32 0.0, %v1230
  %1232 = vmatmul.f32.gmra.mxu0 %v252
  %v1233 = vpop.f32.mrf.mxu0
  %v1234 = vadd.f32 0.0, %v1233
  %1235 = vmatmul.f32.gmra.mxu0 %v255
  %v1236 = vpop.f32.mrf.mxu0
  %v1237 = vadd.f32 0.0, %v1236
  %1238 = vmatmul.f32.gmra.mxu0 %v258
  %v1239 = vpop.f32.mrf.mxu0
  %v1240 = vadd.f32 0.0, %v1239
  %1241 = vmatmul.f32.gmra.mxu0 %v261
  %v1242 = vpop.f32.mrf.mxu0
  %v1243 = vadd.f32 0.0, %v1242
  %1244 = vdwg.mxu0
  %1245 = vmatpush.msra.mxu0 0.0
  %1246 = vmatpush.msra.mxu0 0.0
  %1247 = vmatpush.msra.mxu0 0.0
  %1248 = vmatpush.msra.mxu0 0.0
  %1249 = vmatpush.msra.mxu0 0.0
  %1250 = vmatpush.msra.mxu0 0.0
  %1251 = vmatpush.msra.mxu0 0.0
  %1252 = vmatpush.msra.mxu0 0.0
  %1253 = vmatpush.msra.mxu0 0.0
  %1254 = vmatpush.msra.mxu0 0.0
  %1255 = vmatpush.msra.mxu0 0.0
  %1256 = vmatpush.msra.mxu0 0.0
  %1257 = vmatpush.msra.mxu0 0.0
  %1258 = vmatpush.msra.mxu0 0.0
  %1259 = vmatpush.msra.mxu0 %v1119
  %1260 = vmatpush.msra.mxu0 %v1116
  %1261 = vmatmul.f32.gmra.mxu0 %v216
  %v1262 = vpop.f32.mrf.mxu0
  %v1263 = vadd.f32 0.0, %v1262
  %1264 = vmatmul.f32.gmra.mxu0 %v219
  %v1265 = vpop.f32.mrf.mxu0
  %v1266 = vadd.f32 0.0, %v1265
  %1267 = vmatmul.f32.gmra.mxu0 %v222
  %v1268 = vpop.f32.mrf.mxu0
  %v1269 = vadd.f32 0.0, %v1268
  %1270 = vmatmul.f32.gmra.mxu0 %v225
  %v1271 = vpop.f32.mrf.mxu0
  %v1272 = vadd.f32 0.0, %v1271
  %1273 = vmatmul.f32.gmra.mxu0 %v228
  %v1274 = vpop.f32.mrf.mxu0
  %v1275 = vadd.f32 0.0, %v1274
  %1276 = vmatmul.f32.gmra.mxu0 %v231
  %v1277 = vpop.f32.mrf.mxu0
  %v1278 = vadd.f32 0.0, %v1277
  %1279 = vmatmul.f32.gmra.mxu0 %v234
  %v1280 = vpop.f32.mrf.mxu0
  %v1281 = vadd.f32 0.0, %v1280
  %1282 = vmatmul.f32.gmra.mxu0 %v237
  %v1283 = vpop.f32.mrf.mxu0
  %v1284 = vadd.f32 0.0, %v1283
  %1285 = vmatmul.f32.gmra.mxu0 %v240
  %v1286 = vpop.f32.mrf.mxu0
  %v1287 = vadd.f32 0.0, %v1286
  %1288 = vmatmul.f32.gmra.mxu0 %v243
  %v1289 = vpop.f32.mrf.mxu0
  %v1290 = vadd.f32 0.0, %v1289
  %1291 = vmatmul.f32.gmra.mxu0 %v246
  %v1292 = vpop.f32.mrf.mxu0
  %v1293 = vadd.f32 0.0, %v1292
  %1294 = vmatmul.f32.gmra.mxu0 %v249
  %v1295 = vpop.f32.mrf.mxu0
  %v1296 = vadd.f32 0.0, %v1295
  %1297 = vmatmul.f32.gmra.mxu0 %v252
  %v1298 = vpop.f32.mrf.mxu0
  %v1299 = vadd.f32 0.0, %v1298
  %1300 = vmatmul.f32.gmra.mxu0 %v255
  %v1301 = vpop.f32.mrf.mxu0
  %v1302 = vadd.f32 0.0, %v1301
  %1303 = vmatmul.f32.gmra.mxu0 %v258
  %v1304 = vpop.f32.mrf.mxu0
  %v1305 = vadd.f32 0.0, %v1304
  %1306 = vmatmul.f32.gmra.mxu0 %v261
  %v1307 = vpop.f32.mrf.mxu0
  %v1308 = vadd.f32 0.0, %v1307
  %1309 = vdwg.mxu0
  %1310 = vmatpush.msra.mxu0 0.0
  %1311 = vmatpush.msra.mxu0 0.0
  %1312 = vmatpush.msra.mxu0 0.0
  %1313 = vmatpush.msra.mxu0 0.0
  %1314 = vmatpush.msra.mxu0 0.0
  %1315 = vmatpush.msra.mxu0 0.0
  %1316 = vmatpush.msra.mxu0 0.0
  %1317 = vmatpush.msra.mxu0 0.0
  %1318 = vmatpush.msra.mxu0 0.0
  %1319 = vmatpush.msra.mxu0 0.0
  %1320 = vmatpush.msra.mxu0 0.0
  %1321 = vmatpush.msra.mxu0 0.0
  %1322 = vmatpush.msra.mxu0 0.0
  %1323 = vmatpush.msra.mxu0 0.0
  %1324 = vmatpush.msra.mxu0 0.0
  %1325 = vmatpush.msra.mxu0 %v1172
  %1326 = vmatmul.f32.gmra.mxu0 %v395
  %v1327 = vpop.f32.mrf.mxu0
  %v1328 = vadd.f32 0.0, %v1327
  %1329 = vmatmul.f32.gmra.mxu0 %v398
  %v1330 = vpop.f32.mrf.mxu0
  %v1331 = vadd.f32 0.0, %v1330
  %1332 = vmatmul.f32.gmra.mxu0 %v401
  %v1333 = vpop.f32.mrf.mxu0
  %v1334 = vadd.f32 0.0, %v1333
  %1335 = vmatmul.f32.gmra.mxu0 %v404
  %v1336 = vpop.f32.mrf.mxu0
  %v1337 = vadd.f32 0.0, %v1336
  %1338 = vmatmul.f32.gmra.mxu0 %v407
  %v1339 = vpop.f32.mrf.mxu0
  %v1340 = vadd.f32 0.0, %v1339
  %1341 = vmatmul.f32.gmra.mxu0 %v410
  %v1342 = vpop.f32.mrf.mxu0
  %v1343 = vadd.f32 0.0, %v1342
  %1344 = vmatmul.f32.gmra.mxu0 %v413
  %v1345 = vpop.f32.mrf.mxu0
  %v1346 = vadd.f32 0.0, %v1345
  %1347 = vmatmul.f32.gmra.mxu0 %v416
  %v1348 = vpop.f32.mrf.mxu0
  %v1349 = vadd.f32 0.0, %v1348
  %1350 = vmatmul.f32.gmra.mxu0 %v419
  %v1351 = vpop.f32.mrf.mxu0
  %v1352 = vadd.f32 0.0, %v1351
  %1353 = vmatmul.f32.gmra.mxu0 %v422
  %v1354 = vpop.f32.mrf.mxu0
  %v1355 = vadd.f32 0.0, %v1354
  %1356 = vmatmul.f32.gmra.mxu0 %v425
  %v1357 = vpop.f32.mrf.mxu0
  %v1358 = vadd.f32 0.0, %v1357
  %1359 = vmatmul.f32.gmra.mxu0 %v428
  %v1360 = vpop.f32.mrf.mxu0
  %v1361 = vadd.f32 0.0, %v1360
  %1362 = vmatmul.f32.gmra.mxu0 %v431
  %v1363 = vpop.f32.mrf.mxu0
  %v1364 = vadd.f32 0.0, %v1363
  %1365 = vmatmul.f32.gmra.mxu0 %v434
  %v1366 = vpop.f32.mrf.mxu0
  %v1367 = vadd.f32 0.0, %v1366
  %1368 = vmatmul.f32.gmra.mxu0 %v437
  %v1369 = vpop.f32.mrf.mxu0
  %v1370 = vadd.f32 0.0, %v1369
  %1371 = vmatmul.f32.gmra.mxu0 %v440
  %v1372 = vpop.f32.mrf.mxu0
  %v1373 = vadd.f32 0.0, %v1372
  %1374 = vdwg.mxu0
  %v1375 = vmul.f32 %v1175, %v80
  %v1376 = vmul.f32 %v1176, %v80
  %v1377 = vmul.f32 %v1178, %v80
  %v1378 = vmul.f32 %v1179, %v80
  %v1380 = vsel %vm86, %v1377, 0
  %v1383 = vsel %vm86, %v1378, 0
  %v1386 = vsel %vm86, %v1328, 0
  %v1389 = vsel %vm86, %v1331, 0
  %v1392 = vsel %vm86, %v1334, 0
  %v1395 = vsel %vm86, %v1337, 0
  %v1398 = vsel %vm86, %v1340, 0
  %v1401 = vsel %vm86, %v1343, 0
  %v1404 = vsel %vm86, %v1346, 0
  %v1407 = vsel %vm86, %v1349, 0
  %v1410 = vsel %vm86, %v1352, 0
  %v1413 = vsel %vm86, %v1355, 0
  %v1416 = vsel %vm86, %v1358, 0
  %v1419 = vsel %vm86, %v1361, 0
  %v1422 = vsel %vm86, %v1364, 0
  %v1425 = vsel %vm86, %v1367, 0
  %v1428 = vsel %vm86, %v1370, 0
  %v1431 = vsel %vm86, %v1373, 0
  %1433 = vmatpush.xpose.msra.mxu0 %v1431
  %1434 = vmatpush.xpose.msra.mxu0 %v1428
  %1435 = vmatpush.xpose.msra.mxu0 %v1425
  %1436 = vmatpush.xpose.msra.mxu0 %v1422
  %1437 = vmatpush.xpose.msra.mxu0 %v1419
  %1438 = vmatpush.xpose.msra.mxu0 %v1416
  %1439 = vmatpush.xpose.msra.mxu0 %v1413
  %1440 = vmatpush.xpose.msra.mxu0 %v1410
  %1441 = vmatpush.xpose.msra.mxu0 %v1407
  %1442 = vmatpush.xpose.msra.mxu0 %v1404
  %1443 = vmatpush.xpose.msra.mxu0 %v1401
  %1444 = vmatpush.xpose.msra.mxu0 %v1398
  %1445 = vmatpush.xpose.msra.mxu0 %v1395
  %1446 = vmatpush.xpose.msra.mxu0 %v1392
  %1447 = vmatpush.xpose.msra.mxu0 %v1389
  %1448 = vmatpush.xpose.msra.mxu0 %v1386
  %1449 = vmatmul.f32.gmra.mxu0 %v1380
  %v1450 = vpop.f32.mrf.mxu0
  %v1451 = vadd.f32 0.0, %v1450
  %1452 = vmatmul.f32.gmra.mxu0 %v1383
  %v1453 = vpop.f32.mrf.mxu0
  %v1454 = vadd.f32 0.0, %v1453
  %1455 = vdwg.mxu0
  %v1457 = vsel %vm86, %v1375, 0
  %v1460 = vsel %vm86, %v1376, 0
  %v1463 = vsel %vm86, %v1198, 0
  %v1466 = vsel %vm86, %v1201, 0
  %v1469 = vsel %vm86, %v1204, 0
  %v1472 = vsel %vm86, %v1207, 0
  %v1475 = vsel %vm86, %v1210, 0
  %v1478 = vsel %vm86, %v1213, 0
  %v1481 = vsel %vm86, %v1216, 0
  %v1484 = vsel %vm86, %v1219, 0
  %v1487 = vsel %vm86, %v1222, 0
  %v1490 = vsel %vm86, %v1225, 0
  %v1493 = vsel %vm86, %v1228, 0
  %v1496 = vsel %vm86, %v1231, 0
  %v1499 = vsel %vm86, %v1234, 0
  %v1502 = vsel %vm86, %v1237, 0
  %v1505 = vsel %vm86, %v1240, 0
  %v1508 = vsel %vm86, %v1243, 0
  %1510 = vmatpush.xpose.msra.mxu0 %v1508
  %1511 = vmatpush.xpose.msra.mxu0 %v1505
  %1512 = vmatpush.xpose.msra.mxu0 %v1502
  %1513 = vmatpush.xpose.msra.mxu0 %v1499
  %1514 = vmatpush.xpose.msra.mxu0 %v1496
  %1515 = vmatpush.xpose.msra.mxu0 %v1493
  %1516 = vmatpush.xpose.msra.mxu0 %v1490
  %1517 = vmatpush.xpose.msra.mxu0 %v1487
  %1518 = vmatpush.xpose.msra.mxu0 %v1484
  %1519 = vmatpush.xpose.msra.mxu0 %v1481
  %1520 = vmatpush.xpose.msra.mxu0 %v1478
  %1521 = vmatpush.xpose.msra.mxu0 %v1475
  %1522 = vmatpush.xpose.msra.mxu0 %v1472
  %1523 = vmatpush.xpose.msra.mxu0 %v1469
  %1524 = vmatpush.xpose.msra.mxu0 %v1466
  %1525 = vmatpush.xpose.msra.mxu0 %v1463
  %1526 = vmatmul.f32.gmra.mxu0 %v1457
  %v1527 = vpop.f32.mrf.mxu0
  %v1528 = vadd.f32 %v1451, %v1527
  %1529 = vmatmul.f32.gmra.mxu0 %v1460
  %v1530 = vpop.f32.mrf.mxu0
  %v1531 = vadd.f32 %v1454, %v1530
  %1532 = vdwg.mxu0
  %v1533 = vadd.f32 %v1528, %v40
  %v1534 = vadd.f32 %v1531, %v41
  %1535 = vmax.xlane.f32.xlu0 %v1533
  %v1536 = vpop.xlane.xlu0 %1535
  %1537 = vmax.xlane.f32.xlu0 %v1534
  %v1538 = vpop.xlane.xlu0 %1537
  %v1539 = vsub.f32 %v1533, %v1536
  %v1540 = vsub.f32 %v1534, %v1538
  %v1541 = vmul.f32 %v1539, 1.442695
  %v1542 = vpow.pop %v1541
  %v1543 = vmul.f32 %v1540, 1.442695
  %v1544 = vpow.pop %v1543
  %1545 = vadd.xlane.f32.xlu0 %v1542
  %v1546 = vpop.xlane.xlu0 %1545
  %1547 = vadd.xlane.f32.xlu0 %v1544
  %v1548 = vpop.xlane.xlu0 %1547
  %v1549 = vrcp.pop %v1546
  %v1550 = vrcp.pop %v1548
  %v1551 = vmul.f32 %v1542, %v1549
  %v1552 = vmul.f32 %v1544, %v1550
  %1553 = vmatpush.msra.mxu0 %v1308
  %1554 = vmatpush.msra.mxu0 %v1305
  %1555 = vmatpush.msra.mxu0 %v1302
  %1556 = vmatpush.msra.mxu0 %v1299
  %1557 = vmatpush.msra.mxu0 %v1296
  %1558 = vmatpush.msra.mxu0 %v1293
  %1559 = vmatpush.msra.mxu0 %v1290
  %1560 = vmatpush.msra.mxu0 %v1287
  %1561 = vmatpush.msra.mxu0 %v1284
  %1562 = vmatpush.msra.mxu0 %v1281
  %1563 = vmatpush.msra.mxu0 %v1278
  %1564 = vmatpush.msra.mxu0 %v1275
  %1565 = vmatpush.msra.mxu0 %v1272
  %1566 = vmatpush.msra.mxu0 %v1269
  %1567 = vmatpush.msra.mxu0 %v1266
  %1568 = vmatpush.msra.mxu0 %v1263
  %1569 = vmatmul.f32.gmra.mxu0 %v1551
  %v1570 = vpop.f32.mrf.mxu0
  %v1571 = vadd.f32 0.0, %v1570
  %1572 = vmatmul.f32.gmra.mxu0 %v1552
  %v1573 = vpop.f32.mrf.mxu0
  %v1574 = vadd.f32 0.0, %v1573
  %1575 = vdwg.mxu0
  %v1576 = vmul.f32 %v1571, %v80
  %v1577 = vmul.f32 %v1574, %v80
  %v1578 = vadd.f32 %v1576, 0.0
  %v1579 = vadd.f32 %v1577, 0.0
  %v1580 = vmul.f32 %v1175, %v85
  %v1581 = vmul.f32 %v1176, %v85
  %v1582 = vmul.f32 %v1178, %v85
  %v1583 = vmul.f32 %v1179, %v85
  %v1585 = vsel %vm86, %v1582, 0
  %v1588 = vsel %vm86, %v1583, 0
  %1590 = vmatpush.xpose.msra.mxu0 %v1431
  %1591 = vmatpush.xpose.msra.mxu0 %v1428
  %1592 = vmatpush.xpose.msra.mxu0 %v1425
  %1593 = vmatpush.xpose.msra.mxu0 %v1422
  %1594 = vmatpush.xpose.msra.mxu0 %v1419
  %1595 = vmatpush.xpose.msra.mxu0 %v1416
  %1596 = vmatpush.xpose.msra.mxu0 %v1413
  %1597 = vmatpush.xpose.msra.mxu0 %v1410
  %1598 = vmatpush.xpose.msra.mxu0 %v1407
  %1599 = vmatpush.xpose.msra.mxu0 %v1404
  %1600 = vmatpush.xpose.msra.mxu0 %v1401
  %1601 = vmatpush.xpose.msra.mxu0 %v1398
  %1602 = vmatpush.xpose.msra.mxu0 %v1395
  %1603 = vmatpush.xpose.msra.mxu0 %v1392
  %1604 = vmatpush.xpose.msra.mxu0 %v1389
  %1605 = vmatpush.xpose.msra.mxu0 %v1386
  %1606 = vmatmul.f32.gmra.mxu0 %v1585
  %v1607 = vpop.f32.mrf.mxu0
  %v1608 = vadd.f32 0.0, %v1607
  %1609 = vmatmul.f32.gmra.mxu0 %v1588
  %v1610 = vpop.f32.mrf.mxu0
  %v1611 = vadd.f32 0.0, %v1610
  %1612 = vdwg.mxu0
  %v1614 = vsel %vm86, %v1580, 0
  %v1617 = vsel %vm86, %v1581, 0
  %1619 = vmatpush.xpose.msra.mxu0 %v1508
  %1620 = vmatpush.xpose.msra.mxu0 %v1505
  %1621 = vmatpush.xpose.msra.mxu0 %v1502
  %1622 = vmatpush.xpose.msra.mxu0 %v1499
  %1623 = vmatpush.xpose.msra.mxu0 %v1496
  %1624 = vmatpush.xpose.msra.mxu0 %v1493
  %1625 = vmatpush.xpose.msra.mxu0 %v1490
  %1626 = vmatpush.xpose.msra.mxu0 %v1487
  %1627 = vmatpush.xpose.msra.mxu0 %v1484
  %1628 = vmatpush.xpose.msra.mxu0 %v1481
  %1629 = vmatpush.xpose.msra.mxu0 %v1478
  %1630 = vmatpush.xpose.msra.mxu0 %v1475
  %1631 = vmatpush.xpose.msra.mxu0 %v1472
  %1632 = vmatpush.xpose.msra.mxu0 %v1469
  %1633 = vmatpush.xpose.msra.mxu0 %v1466
  %1634 = vmatpush.xpose.msra.mxu0 %v1463
  %1635 = vmatmul.f32.gmra.mxu0 %v1614
  %v1636 = vpop.f32.mrf.mxu0
  %v1637 = vadd.f32 %v1608, %v1636
  %1638 = vmatmul.f32.gmra.mxu0 %v1617
  %v1639 = vpop.f32.mrf.mxu0
  %v1640 = vadd.f32 %v1611, %v1639
  %1641 = vdwg.mxu0
  %v1642 = vadd.f32 %v1637, %v40
  %v1643 = vadd.f32 %v1640, %v41
  %1644 = vmax.xlane.f32.xlu0 %v1642
  %v1645 = vpop.xlane.xlu0 %1644
  %1646 = vmax.xlane.f32.xlu0 %v1643
  %v1647 = vpop.xlane.xlu0 %1646
  %v1648 = vsub.f32 %v1642, %v1645
  %v1649 = vsub.f32 %v1643, %v1647
  %v1650 = vmul.f32 %v1648, 1.442695
  %v1651 = vpow.pop %v1650
  %v1652 = vmul.f32 %v1649, 1.442695
  %v1653 = vpow.pop %v1652
  %1654 = vadd.xlane.f32.xlu0 %v1651
  %v1655 = vpop.xlane.xlu0 %1654
  %1656 = vadd.xlane.f32.xlu0 %v1653
  %v1657 = vpop.xlane.xlu0 %1656
  %v1658 = vrcp.pop %v1655
  %v1659 = vrcp.pop %v1657
  %v1660 = vmul.f32 %v1651, %v1658
  %v1661 = vmul.f32 %v1653, %v1659
  %1662 = vmatpush.msra.mxu0 %v1308
  %1663 = vmatpush.msra.mxu0 %v1305
  %1664 = vmatpush.msra.mxu0 %v1302
  %1665 = vmatpush.msra.mxu0 %v1299
  %1666 = vmatpush.msra.mxu0 %v1296
  %1667 = vmatpush.msra.mxu0 %v1293
  %1668 = vmatpush.msra.mxu0 %v1290
  %1669 = vmatpush.msra.mxu0 %v1287
  %1670 = vmatpush.msra.mxu0 %v1284
  %1671 = vmatpush.msra.mxu0 %v1281
  %1672 = vmatpush.msra.mxu0 %v1278
  %1673 = vmatpush.msra.mxu0 %v1275
  %1674 = vmatpush.msra.mxu0 %v1272
  %1675 = vmatpush.msra.mxu0 %v1269
  %1676 = vmatpush.msra.mxu0 %v1266
  %1677 = vmatpush.msra.mxu0 %v1263
  %1678 = vmatmul.f32.gmra.mxu0 %v1660
  %v1679 = vpop.f32.mrf.mxu0
  %v1680 = vadd.f32 0.0, %v1679
  %1681 = vmatmul.f32.gmra.mxu0 %v1661
  %v1682 = vpop.f32.mrf.mxu0
  %v1683 = vadd.f32 0.0, %v1682
  %1684 = vdwg.mxu0
  %v1685 = vmul.f32 %v1680, %v85
  %v1686 = vmul.f32 %v1683, %v85
  %v1687 = vadd.f32 %v1578, %v1685
  %v1688 = vadd.f32 %v1579, %v1686
  %s1689 = scalar_lea.vmem %s5, 288
  %v1690 = vld [vmem:[%s1689] sm:$0xff]
  %v1691 = vld [vmem:[%s1689 + $0x8] sm:$0xff]
  %v1692 = vld [vmem:[%s1689 + $0x10] sm:$0xff]
  %v1693 = vld [vmem:[%s1689 + $0x18] sm:$0xff]
  %v1695 = vsel %vm86, %v1687, 0
  %v1698 = vsel %vm86, %v1688, 0
  %1700 = vmatpush.msra.mxu0 0.0
  %1701 = vmatpush.msra.mxu0 0.0
  %1702 = vmatpush.msra.mxu0 0.0
  %1703 = vmatpush.msra.mxu0 0.0
  %1704 = vmatpush.msra.mxu0 0.0
  %1705 = vmatpush.msra.mxu0 0.0
  %1706 = vmatpush.msra.mxu0 0.0
  %1707 = vmatpush.msra.mxu0 0.0
  %1708 = vmatpush.msra.mxu0 0.0
  %1709 = vmatpush.msra.mxu0 0.0
  %1710 = vmatpush.msra.mxu0 0.0
  %1711 = vmatpush.msra.mxu0 0.0
  %1712 = vmatpush.msra.mxu0 %v1693
  %1713 = vmatpush.msra.mxu0 %v1692
  %1714 = vmatpush.msra.mxu0 %v1691
  %1715 = vmatpush.msra.mxu0 %v1690
  %1716 = vmatmul.f32.gmra.mxu0 %v1695
  %v1717 = vpop.f32.mrf.mxu0
  %v1718 = vadd.f32 0.0, %v1717
  %1719 = vmatmul.f32.gmra.mxu0 %v1698
  %v1720 = vpop.f32.mrf.mxu0
  %v1721 = vadd.f32 0.0, %v1720
  %1722 = vdwg.mxu0
  %v1723 = vadd.f32 %v1050, %v1718
  %v1724 = vadd.f32 %v1051, %v1721
  %v1725 = vsel %vm86, %v1723, 0.0
  %1726 = vadd.xlane.f32.xlu0 %v1725
  %v1727 = vpop.xlane.xlu0 %1726
  %v1728 = vsel %vm86, %v1724, 0.0
  %1729 = vadd.xlane.f32.xlu0 %v1728
  %v1730 = vpop.xlane.xlu0 %1729
  %v1731 = vmul.f32 %v1727, %v869
  %v1732 = vmul.f32 %v1730, %v869
  %v1733 = vsub.f32 %v1723, %v1731
  %v1734 = vsub.f32 %v1724, %v1732
  %v1735 = vmul.f32 %v1733, %v1733
  %v1736 = vmul.f32 %v1734, %v1734
  %v1737 = vsel %vm86, %v1735, 0.0
  %1738 = vadd.xlane.f32.xlu0 %v1737
  %v1739 = vpop.xlane.xlu0 %1738
  %v1740 = vsel %vm86, %v1736, 0.0
  %1741 = vadd.xlane.f32.xlu0 %v1740
  %v1742 = vpop.xlane.xlu0 %1741
  %v1743 = vmul.f32 %v1739, %v869
  %v1744 = vmul.f32 %v1742, %v869
  %v1745 = vadd.f32 %v1743, 1e-05
  %v1746 = vadd.f32 %v1744, 1e-05
  %v1747 = vrsqrt.pop %v1745
  %v1748 = vmul.f32 %v1747, %v1745
  %v1749 = vmul.f32 %v1748, %v1747
  %v1750 = vmul.f32 0.5, %v1749
  %v1751 = vsub.f32 1.5, %v1750
  %v1752 = vmul.f32 %v1747, %v1751
  %vm1753 = vweird.f32 %v1745
  %vm1754 = vweird.f32 %v1747
  %vm1755 = vmor %vm1753, %vm1754
  %v1756 = vsel %vm1755, %v1747, %v1752
  %v1757 = vrsqrt.pop %v1746
  %v1758 = vmul.f32 %v1757, %v1746
  %v1759 = vmul.f32 %v1758, %v1757
  %v1760 = vmul.f32 0.5, %v1759
  %v1761 = vsub.f32 1.5, %v1760
  %v1762 = vmul.f32 %v1757, %v1761
  %vm1763 = vweird.f32 %v1746
  %vm1764 = vweird.f32 %v1757
  %vm1765 = vmor %vm1763, %vm1764
  %v1766 = vsel %vm1765, %v1757, %v1762
  %v1767 = vmul.f32 %v1733, %v1756
  %v1768 = vmul.f32 %v1734, %v1766
  %v1769 = vperm.slane %v1056, 0
  %v1770 = vmul.f32 %v1767, %v1769
  %v1771 = vmul.f32 %v1768, %v1769
  %v1772 = vperm.slane %v1056, 1
  %v1773 = vadd.f32 %v1770, %v1772
  %v1774 = vadd.f32 %v1771, %v1772
  %s1775 = scalar_lea.vmem %s6, 64
  %v1776 = vld [vmem:[%s1775] sm:$0xff]
  %v1777 = vld [vmem:[%s1775 + $0x8] sm:$0xff]
  %v1778 = vld [vmem:[%s1775 + $0x10] sm:$0xff]
  %v1779 = vld [vmem:[%s1775 + $0x18] sm:$0xff]
  %v1781 = vperm.slane %v1058, 0
  %v1784 = vsel %vm86, %v1773, 0
  %v1787 = vsel %vm86, %v1774, 0
  %1789 = vmatpush.msra.mxu0 0.0
  %1790 = vmatpush.msra.mxu0 0.0
  %1791 = vmatpush.msra.mxu0 0.0
  %1792 = vmatpush.msra.mxu0 0.0
  %1793 = vmatpush.msra.mxu0 0.0
  %1794 = vmatpush.msra.mxu0 0.0
  %1795 = vmatpush.msra.mxu0 0.0
  %1796 = vmatpush.msra.mxu0 0.0
  %1797 = vmatpush.msra.mxu0 0.0
  %1798 = vmatpush.msra.mxu0 0.0
  %1799 = vmatpush.msra.mxu0 0.0
  %1800 = vmatpush.msra.mxu0 0.0
  %1801 = vmatpush.msra.mxu0 %v1779
  %1802 = vmatpush.msra.mxu0 %v1778
  %1803 = vmatpush.msra.mxu0 %v1777
  %1804 = vmatpush.msra.mxu0 %v1776
  %1805 = vmatmul.f32.gmra.mxu0 %v1784
  %v1806 = vpop.f32.mrf.mxu0
  %v1807 = vadd.f32 %v1781, %v1806
  %1808 = vmatmul.f32.gmra.mxu0 %v1787
  %v1809 = vpop.f32.mrf.mxu0
  %v1810 = vadd.f32 %v1781, %v1809
  %1811 = vdwg.mxu0
  %v1812 = vmax.f32 %v1807, 0.0
  %v1813 = vmax.f32 %v1810, 0.0
  %s1814 = scalar_lea.vmem %s6, 96
  %v1815 = vld [vmem:[%s1814] sm:$0xff]
  %v1816 = vld [vmem:[%s1814 + $0x8] sm:$0xff]
  %v1817 = vld [vmem:[%s1814 + $0x10] sm:$0xff]
  %v1818 = vld [vmem:[%s1814 + $0x18] sm:$0xff]
  %v1819 = vperm.slane %v1056, 4
  %v1821 = vsel %vm958, %v1812, 0
  %v1824 = vsel %vm958, %v1813, 0
  %v1827 = vsel %vm958, %v1815, 0
  %v1830 = vsel %vm958, %v1816, 0
  %v1833 = vsel %vm958, %v1817, 0
  %v1836 = vsel %vm958, %v1818, 0
  %1838 = vmatpush.xpose.msra.mxu0 0.0
  %1839 = vmatpush.xpose.msra.mxu0 0.0
  %1840 = vmatpush.xpose.msra.mxu0 0.0
  %1841 = vmatpush.xpose.msra.mxu0 0.0
  %1842 = vmatpush.xpose.msra.mxu0 0.0
  %1843 = vmatpush.xpose.msra.mxu0 0.0
  %1844 = vmatpush.xpose.msra.mxu0 0.0
  %1845 = vmatpush.xpose.msra.mxu0 0.0
  %1846 = vmatpush.xpose.msra.mxu0 0.0
  %1847 = vmatpush.xpose.msra.mxu0 0.0
  %1848 = vmatpush.xpose.msra.mxu0 0.0
  %1849 = vmatpush.xpose.msra.mxu0 0.0
  %1850 = vmatpush.xpose.msra.mxu0 %v1836
  %1851 = vmatpush.xpose.msra.mxu0 %v1833
  %1852 = vmatpush.xpose.msra.mxu0 %v1830
  %1853 = vmatpush.xpose.msra.mxu0 %v1827
  %1854 = vmatmul.f32.gmra.mxu0 %v1821
  %v1855 = vpop.f32.mrf.mxu0
  %v1856 = vadd.f32 %v1819, %v1855
  %1857 = vmatmul.f32.gmra.mxu0 %v1824
  %v1858 = vpop.f32.mrf.mxu0
  %v1859 = vadd.f32 %v1819, %v1858
  %1860 = vdwg.mxu0
  %v1861 = vadd.f32 %v1773, %v1856
  %v1862 = vadd.f32 %v1774, %v1859
  %v1863 = vsel %vm86, %v1861, 0.0
  %1864 = vadd.xlane.f32.xlu0 %v1863
  %v1865 = vpop.xlane.xlu0 %1864
  %v1866 = vsel %vm86, %v1862, 0.0
  %1867 = vadd.xlane.f32.xlu0 %v1866
  %v1868 = vpop.xlane.xlu0 %1867
  %v1869 = vmul.f32 %v1865, %v869
  %v1870 = vmul.f32 %v1868, %v869
  %v1871 = vsub.f32 %v1861, %v1869
  %v1872 = vsub.f32 %v1862, %v1870
  %v1873 = vmul.f32 %v1871, %v1871
  %v1874 = vmul.f32 %v1872, %v1872
  %v1875 = vsel %vm86, %v1873, 0.0
  %1876 = vadd.xlane.f32.xlu0 %v1875
  %v1877 = vpop.xlane.xlu0 %1876
  %v1878 = vsel %vm86, %v1874, 0.0
  %1879 = vadd.xlane.f32.xlu0 %v1878
  %v1880 = vpop.xlane.xlu0 %1879
  %v1881 = vmul.f32 %v1877, %v869
  %v1882 = vmul.f32 %v1880, %v869
  %v1883 = vadd.f32 %v1881, 1e-05
  %v1884 = vadd.f32 %v1882, 1e-05
  %v1885 = vrsqrt.pop %v1883
  %v1886 = vmul.f32 %v1885, %v1883
  %v1887 = vmul.f32 %v1886, %v1885
  %v1888 = vmul.f32 0.5, %v1887
  %v1889 = vsub.f32 1.5, %v1888
  %v1890 = vmul.f32 %v1885, %v1889
  %vm1891 = vweird.f32 %v1883
  %vm1892 = vweird.f32 %v1885
  %vm1893 = vmor %vm1891, %vm1892
  %v1894 = vsel %vm1893, %v1885, %v1890
  %v1895 = vrsqrt.pop %v1884
  %v1896 = vmul.f32 %v1895, %v1884
  %v1897 = vmul.f32 %v1896, %v1895
  %v1898 = vmul.f32 0.5, %v1897
  %v1899 = vsub.f32 1.5, %v1898
  %v1900 = vmul.f32 %v1895, %v1899
  %vm1901 = vweird.f32 %v1884
  %vm1902 = vweird.f32 %v1895
  %vm1903 = vmor %vm1901, %vm1902
  %v1904 = vsel %vm1903, %v1895, %v1900
  %v1905 = vmul.f32 %v1871, %v1894
  %v1906 = vmul.f32 %v1872, %v1904
  %v1907 = vperm.slane %v1056, 2
  %v1908 = vmul.f32 %v1905, %v1907
  %v1909 = vmul.f32 %v1906, %v1907
  %v1910 = vperm.slane %v1056, 3
  %v1911 = vadd.f32 %v1908, %v1910
  %v1912 = vadd.f32 %v1909, %v1910
  %v1913 = vld [vmem:[%s9] sm:$0xff]
  %v1914 = vld [vmem:[%s9 + $0x8] sm:$0xff]
  %v1915 = vld [vmem:[%s9 + $0x10] sm:$0xff]
  %v1916 = vld [vmem:[%s9 + $0x18] sm:$0xff]
  %v1918 = vsel %vm86, %v1911, 0
  %v1921 = vsel %vm86, %v1912, 0
  %1923 = vmatpush.msra.mxu0 0.0
  %1924 = vmatpush.msra.mxu0 0.0
  %1925 = vmatpush.msra.mxu0 0.0
  %1926 = vmatpush.msra.mxu0 0.0
  %1927 = vmatpush.msra.mxu0 0.0
  %1928 = vmatpush.msra.mxu0 0.0
  %1929 = vmatpush.msra.mxu0 0.0
  %1930 = vmatpush.msra.mxu0 0.0
  %1931 = vmatpush.msra.mxu0 0.0
  %1932 = vmatpush.msra.mxu0 0.0
  %1933 = vmatpush.msra.mxu0 0.0
  %1934 = vmatpush.msra.mxu0 0.0
  %1935 = vmatpush.msra.mxu0 %v1916
  %1936 = vmatpush.msra.mxu0 %v1915
  %1937 = vmatpush.msra.mxu0 %v1914
  %1938 = vmatpush.msra.mxu0 %v1913
  %1939 = vmatmul.f32.gmra.mxu0 %v1918
  %v1940 = vpop.f32.mrf.mxu0
  %v1941 = vadd.f32 0.0, %v1940
  %1942 = vmatmul.f32.gmra.mxu0 %v1921
  %v1943 = vpop.f32.mrf.mxu0
  %v1944 = vadd.f32 0.0, %v1943
  %1945 = vdwg.mxu0
  %1946 = vst [vmem:[%s10] sm:$0xff] %v1941
  %1947 = vst [vmem:[%s10 + $0x8] sm:$0xff] %v1944
  // Predicated region
  $region42: #{transformer_decoder_forward.1} parent=0 // pred_check
    _
  $region43: #{transformer_decoder_forward.1} parent=0 // pred_check_branch
    %1949 = sbr.rel (0) target = $region45
  $region44: #{transformer_decoder_forward.1} parent=0 // pred_region
    _
  $region45: #{transformer_decoder_forward.1} parent=0 // pred_fallthru
    _
  // Predicated region
  $region46: #{transformer_decoder_forward.1} parent=0 // pred_check
    _
  $region47: #{transformer_decoder_forward.1} parent=0 // pred_check_branch
    %1951 = sbr.rel (0) target = $region49
  $region48: #{transformer_decoder_forward.1} parent=0 // pred_region
    _
  $region49: #{transformer_decoder_forward.1} parent=0 // pred_fallthru
    _
  // Predicated region
  $region50: #{transformer_decoder_forward.1} parent=0 // pred_check
    _
  $region51: #{transformer_decoder_forward.1} parent=0 // pred_check_branch
    %1953 = sbr.rel (0) target = $region53
  $region52: #{transformer_decoder_forward.1} parent=0 // pred_region
    _
  $region53: #{transformer_decoder_forward.1} parent=0 // pred_fallthru
    _
  // Predicated region
  $region54: #{transformer_decoder_forward.1} parent=0 // pred_check
    _
  $region55: #{transformer_decoder_forward.1} parent=0 // pred_check_branch
    %1955 = sbr.rel (0) target = $region57
  $region56: #{transformer_decoder_forward.1} parent=0 // pred_region
    _
  $region57: #{transformer_decoder_forward.1} parent=0 // pred_fallthru
    _

</llo_original>
